<compile_context>
chip_gen: v5e
topology: v5e:2x2
jax: 0.10.0
libtpu: 0.0.40
codegen_flags: <defaults>
</compile_context>

<pallas_src>
import math
import functools

import jax
import jax.numpy as jnp
from jax.experimental import pallas as pl
from jax.experimental.pallas import tpu as pltpu

# ---------------- synthetic "bert-tiny" config ----------------
HIDDEN = 32
NUM_HEADS = 2
HEAD_DIM = HIDDEN // NUM_HEADS
NUM_LAYERS = 2
INTERMEDIATE = 4 * HIDDEN
VOCAB = 128
MAX_POS = 64
TYPE_VOCAB = 2
NUM_LABELS = 2
LN_EPS = 1e-12
_INV_SQRT2 = 1.0 / math.sqrt(2.0)


# ---------------- in-kernel helpers (traced inside the Pallas body) ----------------
def _ln(x, g, b):
    """LayerNorm over the last axis, f32 stats, HF epsilon."""
    mu = jnp.mean(x, axis=-1, keepdims=True)
    xc = x - mu
    var = jnp.mean(xc * xc, axis=-1, keepdims=True)
    return xc * jax.lax.rsqrt(var + LN_EPS) * g + b


def _gelu(x):
    """Exact (erf) GELU — BERT default hidden_act."""
    return 0.5 * x * (1.0 + jax.lax.erf(x * _INV_SQRT2))


# ---------------- fused encoder kernel (one grid step == one layer) ----------------
def _encoder_kernel(mask_ref, x_ref, emb_g_ref, emb_b_ref,
                    wqkv_ref, bqkv_ref, wo_ref, bo_ref, ln1_g_ref, ln1_b_ref,
                    wi_ref, bi_ref, wo2_ref, bo2_ref, ln2_g_ref, ln2_b_ref,
                    o_ref, *, B, S):
    layer = pl.program_id(0)

    # Layer 0: initialize the resident activation with the embedding LayerNorm.
    @pl.when(layer == 0)
    def _():
        o_ref[...] = _ln(x_ref[...], emb_g_ref[...], emb_b_ref[...])

    x = o_ref[...]                                   # (B*S, HIDDEN), VMEM-resident carry

    # ---- self-attention block (fused QKV -> attention -> out proj -> +res -> LN1) ----
    qkv = jnp.dot(x, wqkv_ref[0], preferred_element_type=jnp.float32) + bqkv_ref[0]
    wo = wo_ref[0]                                   # (HIDDEN, HIDDEN)
    bias = mask_ref[...]                             # (B, 1, S) additive mask bias
    scale = 1.0 / math.sqrt(HEAD_DIM)

    attn_out = None
    for h in range(NUM_HEADS):                       # static unroll, NUM_HEADS == 2
        q = qkv[:, h * HEAD_DIM:(h + 1) * HEAD_DIM].reshape(B, S, HEAD_DIM)
        k = qkv[:, HIDDEN + h * HEAD_DIM:HIDDEN + (h + 1) * HEAD_DIM].reshape(B, S, HEAD_DIM)
        v = qkv[:, 2 * HIDDEN + h * HEAD_DIM:2 * HIDDEN + (h + 1) * HEAD_DIM].reshape(B, S, HEAD_DIM)

        s = jnp.einsum('bqd,bkd->bqk', q, k,
                       preferred_element_type=jnp.float32) * scale
        s = s + bias                                  # (B,1,S) broadcast over queries
        s = s - jnp.max(s, axis=-1, keepdims=True)    # stable softmax
        p = jnp.exp(s)
        p = p / jnp.sum(p, axis=-1, keepdims=True)

        ctx = jnp.einsum('bqk,bkd->bqd', p, v,
                         preferred_element_type=jnp.float32)      # (B, S, Dh)
        ctx = ctx.reshape(B * S, HEAD_DIM)
        # accumulate output projection per head: [c0|c1] @ Wo == c0@Wo[0:Dh] + c1@Wo[Dh:2Dh]
        contrib = jnp.dot(ctx, wo[h * HEAD_DIM:(h + 1) * HEAD_DIM, :],
                          preferred_element_type=jnp.float32)
        attn_out = contrib if attn_out is None else attn_out + contrib

    attn_out = attn_out + bo_ref[0]
    h1 = _ln(attn_out + x, ln1_g_ref[0], ln1_b_ref[0])

    # ---- FFN block (up proj + GELU + down proj + residual + LN2) ----
    inter = _gelu(jnp.dot(h1, wi_ref[0], preferred_element_type=jnp.float32) + bi_ref[0])
    ffn = jnp.dot(inter, wo2_ref[0], preferred_element_type=jnp.float32) + bo2_ref[0]
    o_ref[...] = _ln(ffn + h1, ln2_g_ref[0], ln2_b_ref[0])


def run_encoder(params, x_emb, mask_bias, B, S):
    """x_emb: (B*S, HIDDEN) raw embedding sum; mask_bias: (B, 1, S)."""
    BS = B * S
    L = NUM_LAYERS
    kernel = functools.partial(_encoder_kernel, B=B, S=S)
    return pl.pallas_call(
        kernel,
        out_shape=jax.ShapeDtypeStruct((BS, HIDDEN), jnp.float32),
        grid=(L,),
        in_specs=[
            pl.BlockSpec((B, 1, S), lambda l: (0, 0, 0)),                    # mask bias
            pl.BlockSpec((BS, HIDDEN), lambda l: (0, 0)),                    # raw embeddings
            pl.BlockSpec((1, HIDDEN), lambda l: (0, 0)),                     # emb LN gamma
            pl.BlockSpec((1, HIDDEN), lambda l: (0, 0)),                     # emb LN beta
            pl.BlockSpec((1, HIDDEN, 3 * HIDDEN), lambda l: (l, 0, 0)),      # fused Wqkv
            pl.BlockSpec((1, 1, 3 * HIDDEN), lambda l: (l, 0, 0)),           # fused bqkv
            pl.BlockSpec((1, HIDDEN, HIDDEN), lambda l: (l, 0, 0)),          # Wo
            pl.BlockSpec((1, 1, HIDDEN), lambda l: (l, 0, 0)),               # bo
            pl.BlockSpec((1, 1, HIDDEN), lambda l: (l, 0, 0)),               # ln1 gamma
            pl.BlockSpec((1, 1, HIDDEN), lambda l: (l, 0, 0)),               # ln1 beta
            pl.BlockSpec((1, HIDDEN, INTERMEDIATE), lambda l: (l, 0, 0)),    # Wi
            pl.BlockSpec((1, 1, INTERMEDIATE), lambda l: (l, 0, 0)),         # bi
            pl.BlockSpec((1, INTERMEDIATE, HIDDEN), lambda l: (l, 0, 0)),    # Wo2
            pl.BlockSpec((1, 1, HIDDEN), lambda l: (l, 0, 0)),               # bo2
            pl.BlockSpec((1, 1, HIDDEN), lambda l: (l, 0, 0)),               # ln2 gamma
            pl.BlockSpec((1, 1, HIDDEN), lambda l: (l, 0, 0)),               # ln2 beta
        ],
        out_specs=pl.BlockSpec((BS, HIDDEN), lambda l: (0, 0)),              # carried activation
        compiler_params=pltpu.CompilerParams(dimension_semantics=("arbitrary",)),
    )(mask_bias, x_emb,
      params["emb_ln_g"], params["emb_ln_b"],
      params["wqkv"], params["bqkv"], params["wo"], params["bo"],
      params["ln1_g"], params["ln1_b"],
      params["wi"], params["bi"], params["wo2"], params["bo2"],
      params["ln2_g"], params["ln2_b"])


# ---------------- parameter init (synthetic, stacked per-layer weights) ----------------
def init_params(key):
    def nrm(k, shape, scale=0.02):
        return scale * jax.random.normal(k, shape, dtype=jnp.float32)

    keys = iter(jax.random.split(key, 64))
    L = NUM_LAYERS
    return {
        "word_emb": nrm(next(keys), (VOCAB, HIDDEN)),
        "pos_emb": nrm(next(keys), (MAX_POS, HIDDEN)),
        "tok_emb": nrm(next(keys), (TYPE_VOCAB, HIDDEN)),
        "emb_ln_g": jnp.ones((1, HIDDEN), jnp.float32),
        "emb_ln_b": jnp.zeros((1, HIDDEN), jnp.float32),
        # encoder weights, stacked on a leading layer axis and streamed per grid step
        "wqkv": nrm(next(keys), (L, HIDDEN, 3 * HIDDEN)),   # fused [Wq|Wk|Wv]
        "bqkv": jnp.zeros((L, 1, 3 * HIDDEN), jnp.float32),
        "wo": nrm(next(keys), (L, HIDDEN, HIDDEN)),
        "bo": jnp.zeros((L, 1, HIDDEN), jnp.float32),
        "ln1_g": jnp.ones((L, 1, HIDDEN), jnp.float32),
        "ln1_b": jnp.zeros((L, 1, HIDDEN), jnp.float32),
        "wi": nrm(next(keys), (L, HIDDEN, INTERMEDIATE)),
        "bi": jnp.zeros((L, 1, INTERMEDIATE), jnp.float32),
        "wo2": nrm(next(keys), (L, INTERMEDIATE, HIDDEN)),
        "bo2": jnp.zeros((L, 1, HIDDEN), jnp.float32),
        "ln2_g": jnp.ones((L, 1, HIDDEN), jnp.float32),
        "ln2_b": jnp.zeros((L, 1, HIDDEN), jnp.float32),
        # pooler + classifier head (computed in plain JAX, per perf review)
        "pool_w": nrm(next(keys), (HIDDEN, HIDDEN)),
        "pool_b": jnp.zeros((HIDDEN,), jnp.float32),
        "cls_w": nrm(next(keys), (HIDDEN, NUM_LABELS)),
        "cls_b": jnp.zeros((NUM_LABELS,), jnp.float32),
    }


# ---------------- forward (matches BertForSequenceClassification logits) ----------------
def bert_forward(params, input_ids, lens, mask):
    # `lens` is accepted (as in the PyTorch module signature) but unused by forward.
    del lens
    B, S = input_ids.shape

    # embeddings (gather + sum is XLA glue; the fused kernel does the embedding LN)
    tok_type = jnp.zeros((B, S), dtype=jnp.int32)
    emb = (jnp.take(params["word_emb"], input_ids, axis=0)
           + params["pos_emb"][jnp.arange(S)][None, :, :]
           + jnp.take(params["tok_emb"], tok_type, axis=0))
    x_emb = emb.reshape(B * S, HIDDEN)

    # HF extended attention mask: (1 - mask) * -10000 added to scores
    mask_bias = ((1.0 - mask.astype(jnp.float32)) * -10000.0).reshape(B, 1, S)

    x = run_encoder(params, x_emb, mask_bias, B, S)          # (B*S, HIDDEN)

    # pooler: tanh(W @ [CLS]); classifier head — tiny matmuls, left to XLA fusion.
    cls_tok = x.reshape(B, S, HIDDEN)[:, 0, :]               # (B, HIDDEN)
    pooled = jnp.tanh(cls_tok @ params["pool_w"] + params["pool_b"])
    logits = pooled @ params["cls_w"] + params["cls_b"]      # (B, NUM_LABELS)
    return logits


if __name__ == "__main__":
    root = jax.random.PRNGKey(0)
    k_params, k_ids = jax.random.split(root)

    params = init_params(k_params)

    B, S = 2, 8
    input_ids = jax.random.randint(k_ids, (B, S), 0, VOCAB, dtype=jnp.int32)
    lens = jnp.array([S, S - 2], dtype=jnp.int32)
    mask = (jnp.arange(S)[None, :] < lens[:, None]).astype(jnp.float32)

    fwd = jax.jit(bert_forward)
    logits = fwd(params, input_ids, lens, mask)
    jax.block_until_ready(logits)
    assert logits.shape == (B, NUM_LABELS)
    print("KERNEL_OK")
</pallas_src>

<mosaic_0001>
module attributes {stable_mosaic.version = 11 : i64} {
  func.func @_encoder_kernel(%arg0: i32, %arg1: memref<2x1x8xf32, #tpu.memory_space<vmem>>, %arg2: memref<16x32xf32, #tpu.memory_space<vmem>>, %arg3: memref<1x32xf32, #tpu.memory_space<vmem>>, %arg4: memref<1x32xf32, #tpu.memory_space<vmem>>, %arg5: memref<1x32x96xf32, #tpu.memory_space<vmem>>, %arg6: memref<1x1x96xf32, #tpu.memory_space<vmem>>, %arg7: memref<1x32x32xf32, #tpu.memory_space<vmem>>, %arg8: memref<1x1x32xf32, #tpu.memory_space<vmem>>, %arg9: memref<1x1x32xf32, #tpu.memory_space<vmem>>, %arg10: memref<1x1x32xf32, #tpu.memory_space<vmem>>, %arg11: memref<1x32x128xf32, #tpu.memory_space<vmem>>, %arg12: memref<1x1x128xf32, #tpu.memory_space<vmem>>, %arg13: memref<1x128x32xf32, #tpu.memory_space<vmem>>, %arg14: memref<1x1x32xf32, #tpu.memory_space<vmem>>, %arg15: memref<1x1x32xf32, #tpu.memory_space<vmem>>, %arg16: memref<1x1x32xf32, #tpu.memory_space<vmem>>, %arg17: memref<16x32xf32, #tpu.memory_space<vmem>>) attributes {dimension_semantics = [#tpu.dimension_semantics<arbitrary>], iteration_bounds = array<i64: 2>, scalar_prefetch = 0 : i64, scratch_operands = 0 : i64, tpu.core_type = #tpu.core_type<tc>, window_params = [{pipeline_mode = #tpu.pipeline_mode<synchronous>, transform_indices = @transform_0, window_bounds = array<i64: 2, 1, 8>}, {pipeline_mode = #tpu.pipeline_mode<synchronous>, transform_indices = @transform_1, window_bounds = array<i64: 16, 32>}, {pipeline_mode = #tpu.pipeline_mode<synchronous>, transform_indices = @transform_2, window_bounds = array<i64: 1, 32>}, {pipeline_mode = #tpu.pipeline_mode<synchronous>, transform_indices = @transform_3, window_bounds = array<i64: 1, 32>}, {transform_indices = @transform_4, window_bounds = array<i64: 1, 32, 96>}, {transform_indices = @transform_5, window_bounds = array<i64: 1, 1, 96>}, {transform_indices = @transform_6, window_bounds = array<i64: 1, 32, 32>}, {transform_indices = @transform_7, window_bounds = array<i64: 1, 1, 32>}, {transform_indices = @transform_8, window_bounds = array<i64: 1, 1, 32>}, {transform_indices = @transform_9, window_bounds = array<i64: 1, 1, 32>}, {transform_indices = @transform_10, window_bounds = array<i64: 1, 32, 128>}, {transform_indices = @transform_11, window_bounds = array<i64: 1, 1, 128>}, {transform_indices = @transform_12, window_bounds = array<i64: 1, 128, 32>}, {transform_indices = @transform_13, window_bounds = array<i64: 1, 1, 32>}, {transform_indices = @transform_14, window_bounds = array<i64: 1, 1, 32>}, {transform_indices = @transform_15, window_bounds = array<i64: 1, 1, 32>}, {pipeline_mode = #tpu.pipeline_mode<synchronous>, transform_indices = @transform_16, window_bounds = array<i64: 16, 32>}]} {
    %c0_i32 = arith.constant 0 : i32
    %0 = arith.cmpi eq, %arg0, %c0_i32 : i32
    %1 = arith.extui %0 : i1 to i32
    %c0_i32_0 = arith.constant 0 : i32
    %2 = arith.cmpi ne, %1, %c0_i32_0 : i32
    scf.if %2 {
      %c0_70 = arith.constant 0 : index
      %c0_71 = arith.constant 0 : index
      %140 = vector.load %arg2[%c0_70, %c0_71] : memref<16x32xf32, #tpu.memory_space<vmem>>, vector<16x32xf32>
      %c0_72 = arith.constant 0 : index
      %c0_73 = arith.constant 0 : index
      %141 = vector.load %arg3[%c0_72, %c0_73] : memref<1x32xf32, #tpu.memory_space<vmem>>, vector<1x32xf32>
      %c0_74 = arith.constant 0 : index
      %c0_75 = arith.constant 0 : index
      %142 = vector.load %arg4[%c0_74, %c0_75] : memref<1x32xf32, #tpu.memory_space<vmem>>, vector<1x32xf32>
      %cst_76 = arith.constant dense<0.000000e+00> : vector<16xf32>
      %143 = vector.multi_reduction <add>, %140, %cst_76 [1] : vector<16x32xf32> to vector<16xf32>
      %144 = vector.shape_cast %143 : vector<16xf32> to vector<16x1xf32>
      %cst_77 = arith.constant 3.200000e+01 : f32
      %145 = vector.broadcast %cst_77 : f32 to vector<16x1xf32>
      %146 = arith.divf %144, %145 : vector<16x1xf32>
      %147 = vector.broadcast %146 : vector<16x1xf32> to vector<16x32xf32>
      %148 = arith.subf %140, %147 : vector<16x32xf32>
      %149 = arith.mulf %148, %148 : vector<16x32xf32>
      %cst_78 = arith.constant dense<0.000000e+00> : vector<16xf32>
      %150 = vector.multi_reduction <add>, %149, %cst_78 [1] : vector<16x32xf32> to vector<16xf32>
      %151 = vector.shape_cast %150 : vector<16xf32> to vector<16x1xf32>
      %cst_79 = arith.constant 3.200000e+01 : f32
      %152 = vector.broadcast %cst_79 : f32 to vector<16x1xf32>
      %153 = arith.divf %151, %152 : vector<16x1xf32>
      %cst_80 = arith.constant 9.99999996E-13 : f32
      %154 = vector.broadcast %cst_80 : f32 to vector<16x1xf32>
      %155 = arith.addf %153, %154 : vector<16x1xf32>
      %156 = math.rsqrt %155 : vector<16x1xf32>
      %157 = vector.broadcast %156 : vector<16x1xf32> to vector<16x32xf32>
      %158 = arith.mulf %148, %157 : vector<16x32xf32>
      %159 = vector.broadcast %141 : vector<1x32xf32> to vector<16x32xf32>
      %160 = arith.mulf %158, %159 : vector<16x32xf32>
      %161 = vector.broadcast %142 : vector<1x32xf32> to vector<16x32xf32>
      %162 = arith.addf %160, %161 : vector<16x32xf32>
      %c0_81 = arith.constant 0 : index
      %c0_82 = arith.constant 0 : index
      %163 = vector.load %arg17[%c0_81, %c0_82] : memref<16x32xf32, #tpu.memory_space<vmem>>, vector<16x32xf32>
      tpu.vector_store %arg17[%c0_81, %c0_82], %162 {strides = array<i32>} : memref<16x32xf32, #tpu.memory_space<vmem>>, vector<16x32xf32>,
    } else {
    }
    %c0 = arith.constant 0 : index
    %c0_1 = arith.constant 0 : index
    %3 = vector.load %arg17[%c0, %c0_1] : memref<16x32xf32, #tpu.memory_space<vmem>>, vector<16x32xf32>
    %c0_2 = arith.constant 0 : index
    %c0_3 = arith.constant 0 : index
    %c0_4 = arith.constant 0 : index
    %4 = vector.load %arg5[%c0_2, %c0_3, %c0_4] : memref<1x32x96xf32, #tpu.memory_space<vmem>>, vector<1x32x96xf32>
    %5 = vector.shape_cast %4 : vector<1x32x96xf32> to vector<32x96xf32>
    %cst = arith.constant dense<0.000000e+00> : vector<16x96xf32>
    %6 = tpu.matmul %3, %5, %cst {dimension_numbers = #tpu.dot_dimension_numbers<[1], [0], [0], [1], [0, 0, 1, 1], [], []>} : vector<16x32xf32>, vector<32x96xf32>, vector<16x96xf32> -> vector<16x96xf32>
    %c0_5 = arith.constant 0 : index
    %c0_6 = arith.constant 0 : index
    %c0_7 = arith.constant 0 : index
    %7 = vector.load %arg6[%c0_5, %c0_6, %c0_7] : memref<1x1x96xf32, #tpu.memory_space<vmem>>, vector<1x1x96xf32>
    %8 = vector.shape_cast %7 : vector<1x1x96xf32> to vector<1x96xf32>
    %9 = vector.broadcast %8 : vector<1x96xf32> to vector<16x96xf32>
    %10 = arith.addf %6, %9 : vector<16x96xf32>
    %c0_8 = arith.constant 0 : index
    %c0_9 = arith.constant 0 : index
    %c0_10 = arith.constant 0 : index
    %11 = vector.load %arg7[%c0_8, %c0_9, %c0_10] : memref<1x32x32xf32, #tpu.memory_space<vmem>>, vector<1x32x32xf32>
    %12 = vector.shape_cast %11 : vector<1x32x32xf32> to vector<32x32xf32>
    %c0_11 = arith.constant 0 : index
    %c0_12 = arith.constant 0 : index
    %c0_13 = arith.constant 0 : index
    %13 = vector.load %arg1[%c0_11, %c0_12, %c0_13] : memref<2x1x8xf32, #tpu.memory_space<vmem>>, vector<2x1x8xf32>
    %14 = vector.extract_strided_slice %10 {offsets = [0, 0], sizes = [16, 16], strides = [1, 1]} : vector<16x96xf32> to vector<16x16xf32>
    %15 = vector.shape_cast %14 : vector<16x16xf32> to vector<2x8x16xf32>
    %16 = vector.extract_strided_slice %10 {offsets = [0, 32], sizes = [16, 16], strides = [1, 1]} : vector<16x96xf32> to vector<16x16xf32>
    %17 = vector.shape_cast %16 : vector<16x16xf32> to vector<2x8x16xf32>
    %18 = vector.extract_strided_slice %10 {offsets = [0, 64], sizes = [16, 16], strides = [1, 1]} : vector<16x96xf32> to vector<16x16xf32>
    %19 = vector.shape_cast %18 : vector<16x16xf32> to vector<2x8x16xf32>
    "tpu.trace_start"() <{level = 10 : i32, message = "bqd,bkd->bqk"}> : () -> ()
    %cst_14 = arith.constant dense<0.000000e+00> : vector<2x8x8xf32>
    %20 = tpu.matmul %15, %17, %cst_14 {dimension_numbers = #tpu.dot_dimension_numbers<[2], [2], [1], [1], [0, 0, 0, 1, 1, 1], [0], [0]>} : vector<2x8x16xf32>, vector<2x8x16xf32>, vector<2x8x8xf32> -> vector<2x8x8xf32>
    "tpu.trace_stop"() : () -> ()
    %cst_15 = arith.constant 2.500000e-01 : f32
    %21 = vector.broadcast %cst_15 : f32 to vector<2x8x8xf32>
    %22 = arith.mulf %20, %21 : vector<2x8x8xf32>
    %23 = vector.broadcast %13 : vector<2x1x8xf32> to vector<2x8x8xf32>
    %24 = arith.addf %22, %23 : vector<2x8x8xf32>
    %cst_16 = arith.constant dense<0xFF800000> : vector<2x8xf32>
    %25 = vector.multi_reduction <maximumf>, %24, %cst_16 [2] : vector<2x8x8xf32> to vector<2x8xf32>
    %26 = vector.shape_cast %25 : vector<2x8xf32> to vector<2x8x1xf32>
    %27 = vector.broadcast %26 : vector<2x8x1xf32> to vector<2x8x8xf32>
    %28 = arith.subf %24, %27 : vector<2x8x8xf32>
    %29 = math.exp %28 : vector<2x8x8xf32>
    %cst_17 = arith.constant dense<0.000000e+00> : vector<2x8xf32>
    %30 = vector.multi_reduction <add>, %29, %cst_17 [2] : vector<2x8x8xf32> to vector<2x8xf32>
    %31 = vector.shape_cast %30 : vector<2x8xf32> to vector<2x8x1xf32>
    %32 = vector.broadcast %31 : vector<2x8x1xf32> to vector<2x8x8xf32>
    %33 = arith.divf %29, %32 : vector<2x8x8xf32>
    "tpu.trace_start"() <{level = 10 : i32, message = "bqk,bkd->bqd"}> : () -> ()
    %cst_18 = arith.constant dense<0.000000e+00> : vector<2x8x16xf32>
    %34 = tpu.matmul %33, %19, %cst_18 {dimension_numbers = #tpu.dot_dimension_numbers<[2], [1], [1], [2], [0, 0, 0, 1, 1, 2], [0], [0]>} : vector<2x8x8xf32>, vector<2x8x16xf32>, vector<2x8x16xf32> -> vector<2x8x16xf32>
    "tpu.trace_stop"() : () -> ()
    %35 = vector.shape_cast %34 : vector<2x8x16xf32> to vector<16x16xf32>
    %36 = vector.extract_strided_slice %12 {offsets = [0, 0], sizes = [16, 32], strides = [1, 1]} : vector<32x32xf32> to vector<16x32xf32>
    %cst_19 = arith.constant dense<0.000000e+00> : vector<16x32xf32>
    %37 = tpu.matmul %35, %36, %cst_19 {dimension_numbers = #tpu.dot_dimension_numbers<[1], [0], [0], [1], [0, 0, 1, 1], [], []>} : vector<16x16xf32>, vector<16x32xf32>, vector<16x32xf32> -> vector<16x32xf32>
    %38 = vector.extract_strided_slice %10 {offsets = [0, 16], sizes = [16, 16], strides = [1, 1]} : vector<16x96xf32> to vector<16x16xf32>
    %39 = vector.shape_cast %38 : vector<16x16xf32> to vector<2x8x16xf32>
    %40 = vector.extract_strided_slice %10 {offsets = [0, 48], sizes = [16, 16], strides = [1, 1]} : vector<16x96xf32> to vector<16x16xf32>
    %41 = vector.shape_cast %40 : vector<16x16xf32> to vector<2x8x16xf32>
    %42 = vector.extract_strided_slice %10 {offsets = [0, 80], sizes = [16, 16], strides = [1, 1]} : vector<16x96xf32> to vector<16x16xf32>
    %43 = vector.shape_cast %42 : vector<16x16xf32> to vector<2x8x16xf32>
    "tpu.trace_start"() <{level = 10 : i32, message = "bqd,bkd->bqk"}> : () -> ()
    %cst_20 = arith.constant dense<0.000000e+00> : vector<2x8x8xf32>
    %44 = tpu.matmul %39, %41, %cst_20 {dimension_numbers = #tpu.dot_dimension_numbers<[2], [2], [1], [1], [0, 0, 0, 1, 1, 1], [0], [0]>} : vector<2x8x16xf32>, vector<2x8x16xf32>, vector<2x8x8xf32> -> vector<2x8x8xf32>
    "tpu.trace_stop"() : () -> ()
    %cst_21 = arith.constant 2.500000e-01 : f32
    %45 = vector.broadcast %cst_21 : f32 to vector<2x8x8xf32>
    %46 = arith.mulf %44, %45 : vector<2x8x8xf32>
    %47 = vector.broadcast %13 : vector<2x1x8xf32> to vector<2x8x8xf32>
    %48 = arith.addf %46, %47 : vector<2x8x8xf32>
    %cst_22 = arith.constant dense<0xFF800000> : vector<2x8xf32>
    %49 = vector.multi_reduction <maximumf>, %48, %cst_22 [2] : vector<2x8x8xf32> to vector<2x8xf32>
    %50 = vector.shape_cast %49 : vector<2x8xf32> to vector<2x8x1xf32>
    %51 = vector.broadcast %50 : vector<2x8x1xf32> to vector<2x8x8xf32>
    %52 = arith.subf %48, %51 : vector<2x8x8xf32>
    %53 = math.exp %52 : vector<2x8x8xf32>
    %cst_23 = arith.constant dense<0.000000e+00> : vector<2x8xf32>
    %54 = vector.multi_reduction <add>, %53, %cst_23 [2] : vector<2x8x8xf32> to vector<2x8xf32>
    %55 = vector.shape_cast %54 : vector<2x8xf32> to vector<2x8x1xf32>
    %56 = vector.broadcast %55 : vector<2x8x1xf32> to vector<2x8x8xf32>
    %57 = arith.divf %53, %56 : vector<2x8x8xf32>
    "tpu.trace_start"() <{level = 10 : i32, message = "bqk,bkd->bqd"}> : () -> ()
    %cst_24 = arith.constant dense<0.000000e+00> : vector<2x8x16xf32>
    %58 = tpu.matmul %57, %43, %cst_24 {dimension_numbers = #tpu.dot_dimension_numbers<[2], [1], [1], [2], [0, 0, 0, 1, 1, 2], [0], [0]>} : vector<2x8x8xf32>, vector<2x8x16xf32>, vector<2x8x16xf32> -> vector<2x8x16xf32>
    "tpu.trace_stop"() : () -> ()
    %59 = vector.shape_cast %58 : vector<2x8x16xf32> to vector<16x16xf32>
    %60 = vector.extract_strided_slice %12 {offsets = [16, 0], sizes = [16, 32], strides = [1, 1]} : vector<32x32xf32> to vector<16x32xf32>
    %cst_25 = arith.constant dense<0.000000e+00> : vector<16x32xf32>
    %61 = tpu.matmul %59, %60, %cst_25 {dimension_numbers = #tpu.dot_dimension_numbers<[1], [0], [0], [1], [0, 0, 1, 1], [], []>} : vector<16x16xf32>, vector<16x32xf32>, vector<16x32xf32> -> vector<16x32xf32>
    %62 = arith.addf %37, %61 : vector<16x32xf32>
    %c0_26 = arith.constant 0 : index
    %c0_27 = arith.constant 0 : index
    %c0_28 = arith.constant 0 : index
    %63 = vector.load %arg8[%c0_26, %c0_27, %c0_28] : memref<1x1x32xf32, #tpu.memory_space<vmem>>, vector<1x1x32xf32>
    %64 = vector.shape_cast %63 : vector<1x1x32xf32> to vector<1x32xf32>
    %65 = vector.broadcast %64 : vector<1x32xf32> to vector<16x32xf32>
    %66 = arith.addf %62, %65 : vector<16x32xf32>
    %67 = arith.addf %66, %3 : vector<16x32xf32>
    %c0_29 = arith.constant 0 : index
    %c0_30 = arith.constant 0 : index
    %c0_31 = arith.constant 0 : index
    %68 = vector.load %arg9[%c0_29, %c0_30, %c0_31] : memref<1x1x32xf32, #tpu.memory_space<vmem>>, vector<1x1x32xf32>
    %69 = vector.shape_cast %68 : vector<1x1x32xf32> to vector<1x32xf32>
    %c0_32 = arith.constant 0 : index
    %c0_33 = arith.constant 0 : index
    %c0_34 = arith.constant 0 : index
    %70 = vector.load %arg10[%c0_32, %c0_33, %c0_34] : memref<1x1x32xf32, #tpu.memory_space<vmem>>, vector<1x1x32xf32>
    %71 = vector.shape_cast %70 : vector<1x1x32xf32> to vector<1x32xf32>
    %cst_35 = arith.constant dense<0.000000e+00> : vector<16xf32>
    %72 = vector.multi_reduction <add>, %67, %cst_35 [1] : vector<16x32xf32> to vector<16xf32>
    %73 = vector.shape_cast %72 : vector<16xf32> to vector<16x1xf32>
    %cst_36 = arith.constant 3.200000e+01 : f32
    %74 = vector.broadcast %cst_36 : f32 to vector<16x1xf32>
    %75 = arith.divf %73, %74 : vector<16x1xf32>
    %76 = vector.broadcast %75 : vector<16x1xf32> to vector<16x32xf32>
    %77 = arith.subf %67, %76 : vector<16x32xf32>
    %78 = arith.mulf %77, %77 : vector<16x32xf32>
    %cst_37 = arith.constant dense<0.000000e+00> : vector<16xf32>
    %79 = vector.multi_reduction <add>, %78, %cst_37 [1] : vector<16x32xf32> to vector<16xf32>
    %80 = vector.shape_cast %79 : vector<16xf32> to vector<16x1xf32>
    %cst_38 = arith.constant 3.200000e+01 : f32
    %81 = vector.broadcast %cst_38 : f32 to vector<16x1xf32>
    %82 = arith.divf %80, %81 : vector<16x1xf32>
    %cst_39 = arith.constant 9.99999996E-13 : f32
    %83 = vector.broadcast %cst_39 : f32 to vector<16x1xf32>
    %84 = arith.addf %82, %83 : vector<16x1xf32>
    %85 = math.rsqrt %84 : vector<16x1xf32>
    %86 = vector.broadcast %85 : vector<16x1xf32> to vector<16x32xf32>
    %87 = arith.mulf %77, %86 : vector<16x32xf32>
    %88 = vector.broadcast %69 : vector<1x32xf32> to vector<16x32xf32>
    %89 = arith.mulf %87, %88 : vector<16x32xf32>
    %90 = vector.broadcast %71 : vector<1x32xf32> to vector<16x32xf32>
    %91 = arith.addf %89, %90 : vector<16x32xf32>
    %c0_40 = arith.constant 0 : index
    %c0_41 = arith.constant 0 : index
    %c0_42 = arith.constant 0 : index
    %92 = vector.load %arg11[%c0_40, %c0_41, %c0_42] : memref<1x32x128xf32, #tpu.memory_space<vmem>>, vector<1x32x128xf32>
    %93 = vector.shape_cast %92 : vector<1x32x128xf32> to vector<32x128xf32>
    %cst_43 = arith.constant dense<0.000000e+00> : vector<16x128xf32>
    %94 = tpu.matmul %91, %93, %cst_43 {dimension_numbers = #tpu.dot_dimension_numbers<[1], [0], [0], [1], [0, 0, 1, 1], [], []>} : vector<16x32xf32>, vector<32x128xf32>, vector<16x128xf32> -> vector<16x128xf32>
    %c0_44 = arith.constant 0 : index
    %c0_45 = arith.constant 0 : index
    %c0_46 = arith.constant 0 : index
    %95 = vector.load %arg12[%c0_44, %c0_45, %c0_46] : memref<1x1x128xf32, #tpu.memory_space<vmem>>, vector<1x1x128xf32>
    %96 = vector.shape_cast %95 : vector<1x1x128xf32> to vector<1x128xf32>
    %97 = vector.broadcast %96 : vector<1x128xf32> to vector<16x128xf32>
    %98 = arith.addf %94, %97 : vector<16x128xf32>
    %cst_47 = arith.constant 5.000000e-01 : f32
    %99 = vector.broadcast %cst_47 : f32 to vector<16x128xf32>
    %100 = arith.mulf %99, %98 : vector<16x128xf32>
    %cst_48 = arith.constant 0.707106769 : f32
    %101 = vector.broadcast %cst_48 : f32 to vector<16x128xf32>
    %102 = arith.mulf %98, %101 : vector<16x128xf32>
    %103 = math.erf %102 : vector<16x128xf32>
    %cst_49 = arith.constant 1.000000e+00 : f32
    %104 = vector.broadcast %cst_49 : f32 to vector<16x128xf32>
    %105 = arith.addf %104, %103 : vector<16x128xf32>
    %106 = arith.mulf %100, %105 : vector<16x128xf32>
    %c0_50 = arith.constant 0 : index
    %c0_51 = arith.constant 0 : index
    %c0_52 = arith.constant 0 : index
    %107 = vector.load %arg13[%c0_50, %c0_51, %c0_52] : memref<1x128x32xf32, #tpu.memory_space<vmem>>, vector<1x128x32xf32>
    %108 = vector.shape_cast %107 : vector<1x128x32xf32> to vector<128x32xf32>
    %cst_53 = arith.constant dense<0.000000e+00> : vector<16x32xf32>
    %109 = tpu.matmul %106, %108, %cst_53 {dimension_numbers = #tpu.dot_dimension_numbers<[1], [0], [0], [1], [0, 0, 1, 1], [], []>} : vector<16x128xf32>, vector<128x32xf32>, vector<16x32xf32> -> vector<16x32xf32>
    %c0_54 = arith.constant 0 : index
    %c0_55 = arith.constant 0 : index
    %c0_56 = arith.constant 0 : index
    %110 = vector.load %arg14[%c0_54, %c0_55, %c0_56] : memref<1x1x32xf32, #tpu.memory_space<vmem>>, vector<1x1x32xf32>
    %111 = vector.shape_cast %110 : vector<1x1x32xf32> to vector<1x32xf32>
    %112 = vector.broadcast %111 : vector<1x32xf32> to vector<16x32xf32>
    %113 = arith.addf %109, %112 : vector<16x32xf32>
    %114 = arith.addf %113, %91 : vector<16x32xf32>
    %c0_57 = arith.constant 0 : index
    %c0_58 = arith.constant 0 : index
    %c0_59 = arith.constant 0 : index
    %115 = vector.load %arg15[%c0_57, %c0_58, %c0_59] : memref<1x1x32xf32, #tpu.memory_space<vmem>>, vector<1x1x32xf32>
    %116 = vector.shape_cast %115 : vector<1x1x32xf32> to vector<1x32xf32>
    %c0_60 = arith.constant 0 : index
    %c0_61 = arith.constant 0 : index
    %c0_62 = arith.constant 0 : index
    %117 = vector.load %arg16[%c0_60, %c0_61, %c0_62] : memref<1x1x32xf32, #tpu.memory_space<vmem>>, vector<1x1x32xf32>
    %118 = vector.shape_cast %117 : vector<1x1x32xf32> to vector<1x32xf32>
    %cst_63 = arith.constant dense<0.000000e+00> : vector<16xf32>
    %119 = vector.multi_reduction <add>, %114, %cst_63 [1] : vector<16x32xf32> to vector<16xf32>
    %120 = vector.shape_cast %119 : vector<16xf32> to vector<16x1xf32>
    %cst_64 = arith.constant 3.200000e+01 : f32
    %121 = vector.broadcast %cst_64 : f32 to vector<16x1xf32>
    %122 = arith.divf %120, %121 : vector<16x1xf32>
    %123 = vector.broadcast %122 : vector<16x1xf32> to vector<16x32xf32>
    %124 = arith.subf %114, %123 : vector<16x32xf32>
    %125 = arith.mulf %124, %124 : vector<16x32xf32>
    %cst_65 = arith.constant dense<0.000000e+00> : vector<16xf32>
    %126 = vector.multi_reduction <add>, %125, %cst_65 [1] : vector<16x32xf32> to vector<16xf32>
    %127 = vector.shape_cast %126 : vector<16xf32> to vector<16x1xf32>
    %cst_66 = arith.constant 3.200000e+01 : f32
    %128 = vector.broadcast %cst_66 : f32 to vector<16x1xf32>
    %129 = arith.divf %127, %128 : vector<16x1xf32>
    %cst_67 = arith.constant 9.99999996E-13 : f32
    %130 = vector.broadcast %cst_67 : f32 to vector<16x1xf32>
    %131 = arith.addf %129, %130 : vector<16x1xf32>
    %132 = math.rsqrt %131 : vector<16x1xf32>
    %133 = vector.broadcast %132 : vector<16x1xf32> to vector<16x32xf32>
    %134 = arith.mulf %124, %133 : vector<16x32xf32>
    %135 = vector.broadcast %116 : vector<1x32xf32> to vector<16x32xf32>
    %136 = arith.mulf %134, %135 : vector<16x32xf32>
    %137 = vector.broadcast %118 : vector<1x32xf32> to vector<16x32xf32>
    %138 = arith.addf %136, %137 : vector<16x32xf32>
    %c0_68 = arith.constant 0 : index
    %c0_69 = arith.constant 0 : index
    %139 = vector.load %arg17[%c0_68, %c0_69] : memref<16x32xf32, #tpu.memory_space<vmem>>, vector<16x32xf32>
    tpu.vector_store %arg17[%c0_68, %c0_69], %138 {strides = array<i32>} : memref<16x32xf32, #tpu.memory_space<vmem>>, vector<16x32xf32>,
    return
  }
  func.func @transform_0(%arg0: i32) -> (i32, i32, i32) {
    %c0_i32 = arith.constant 0 : i32
    %c0_i32_0 = arith.constant 0 : i32
    %c0_i32_1 = arith.constant 0 : i32
    %c0_i32_2 = arith.constant 0 : i32
    return %c0_i32, %c0_i32_0, %c0_i32_1 : i32, i32, i32
  }
  func.func @transform_1(%arg0: i32) -> (i32, i32) {
    %c0_i32 = arith.constant 0 : i32
    %c0_i32_0 = arith.constant 0 : i32
    %c0_i32_1 = arith.constant 0 : i32
    return %c0_i32, %c0_i32_0 : i32, i32
  }
  func.func @transform_2(%arg0: i32) -> (i32, i32) {
    %c0_i32 = arith.constant 0 : i32
    %c0_i32_0 = arith.constant 0 : i32
    %c0_i32_1 = arith.constant 0 : i32
    return %c0_i32, %c0_i32_0 : i32, i32
  }
  func.func @transform_3(%arg0: i32) -> (i32, i32) {
    %c0_i32 = arith.constant 0 : i32
    %c0_i32_0 = arith.constant 0 : i32
    %c0_i32_1 = arith.constant 0 : i32
    return %c0_i32, %c0_i32_0 : i32, i32
  }
  func.func @transform_4(%arg0: i32) -> (i32, i32, i32) {
    %c0_i32 = arith.constant 0 : i32
    %c0_i32_0 = arith.constant 0 : i32
    %c0_i32_1 = arith.constant 0 : i32
    return %arg0, %c0_i32, %c0_i32_0 : i32, i32, i32
  }
  func.func @transform_5(%arg0: i32) -> (i32, i32, i32) {
    %c0_i32 = arith.constant 0 : i32
    %c0_i32_0 = arith.constant 0 : i32
    %c0_i32_1 = arith.constant 0 : i32
    return %arg0, %c0_i32, %c0_i32_0 : i32, i32, i32
  }
  func.func @transform_6(%arg0: i32) -> (i32, i32, i32) {
    %c0_i32 = arith.constant 0 : i32
    %c0_i32_0 = arith.constant 0 : i32
    %c0_i32_1 = arith.constant 0 : i32
    return %arg0, %c0_i32, %c0_i32_0 : i32, i32, i32
  }
  func.func @transform_7(%arg0: i32) -> (i32, i32, i32) {
    %c0_i32 = arith.constant 0 : i32
    %c0_i32_0 = arith.constant 0 : i32
    %c0_i32_1 = arith.constant 0 : i32
    return %arg0, %c0_i32, %c0_i32_0 : i32, i32, i32
  }
  func.func @transform_8(%arg0: i32) -> (i32, i32, i32) {
    %c0_i32 = arith.constant 0 : i32
    %c0_i32_0 = arith.constant 0 : i32
    %c0_i32_1 = arith.constant 0 : i32
    return %arg0, %c0_i32, %c0_i32_0 : i32, i32, i32
  }
  func.func @transform_9(%arg0: i32) -> (i32, i32, i32) {
    %c0_i32 = arith.constant 0 : i32
    %c0_i32_0 = arith.constant 0 : i32
    %c0_i32_1 = arith.constant 0 : i32
    return %arg0, %c0_i32, %c0_i32_0 : i32, i32, i32
  }
  func.func @transform_10(%arg0: i32) -> (i32, i32, i32) {
    %c0_i32 = arith.constant 0 : i32
    %c0_i32_0 = arith.constant 0 : i32
    %c0_i32_1 = arith.constant 0 : i32
    return %arg0, %c0_i32, %c0_i32_0 : i32, i32, i32
  }
  func.func @transform_11(%arg0: i32) -> (i32, i32, i32) {
    %c0_i32 = arith.constant 0 : i32
    %c0_i32_0 = arith.constant 0 : i32
    %c0_i32_1 = arith.constant 0 : i32
    return %arg0, %c0_i32, %c0_i32_0 : i32, i32, i32
  }
  func.func @transform_12(%arg0: i32) -> (i32, i32, i32) {
    %c0_i32 = arith.constant 0 : i32
    %c0_i32_0 = arith.constant 0 : i32
    %c0_i32_1 = arith.constant 0 : i32
    return %arg0, %c0_i32, %c0_i32_0 : i32, i32, i32
  }
  func.func @transform_13(%arg0: i32) -> (i32, i32, i32) {
    %c0_i32 = arith.constant 0 : i32
    %c0_i32_0 = arith.constant 0 : i32
    %c0_i32_1 = arith.constant 0 : i32
    return %arg0, %c0_i32, %c0_i32_0 : i32, i32, i32
  }
  func.func @transform_14(%arg0: i32) -> (i32, i32, i32) {
    %c0_i32 = arith.constant 0 : i32
    %c0_i32_0 = arith.constant 0 : i32
    %c0_i32_1 = arith.constant 0 : i32
    return %arg0, %c0_i32, %c0_i32_0 : i32, i32, i32
  }
  func.func @transform_15(%arg0: i32) -> (i32, i32, i32) {
    %c0_i32 = arith.constant 0 : i32
    %c0_i32_0 = arith.constant 0 : i32
    %c0_i32_1 = arith.constant 0 : i32
    return %arg0, %c0_i32, %c0_i32_0 : i32, i32, i32
  }
  func.func @transform_16(%arg0: i32) -> (i32, i32) {
    %c0_i32 = arith.constant 0 : i32
    %c0_i32_0 = arith.constant 0 : i32
    %c0_i32_1 = arith.constant 0 : i32
    return %c0_i32, %c0_i32_0 : i32, i32
  }
}

</mosaic_0001>

<llo_original>
// kernel: bert_forward.1
$region0: #{bert_forward.1}
  #allocation0 [shape = 'u32[]', space=smem, size = 0x4, offset = 0x4, fixed_abs, tag = 'smem constant byte address 0x4 - core index']
  #allocation1 [shape = 'u32[72,128]{1,0:T(1,128)}', space=vmem, size = 0x9000, scoped, tag = 'internal scratch']
  %s0 = inlined_call_operand.vmem [shape: f32[2,1,8], index: 0, kind: input, shape index: {}]
  %s1 = inlined_call_operand.vmem [shape: f32[16,32], index: 1, kind: input, shape index: {}]
  %s2 = inlined_call_operand.vmem [shape: f32[1,32], index: 2, kind: input, shape index: {}]
  %s3 = inlined_call_operand.vmem [shape: f32[1,32], index: 3, kind: input, shape index: {}]
  %s4 = inlined_call_operand.vmem [shape: f32[2,32,96], index: 4, kind: input, shape index: {}]
  %s5 = inlined_call_operand.vmem [shape: f32[2,1,96], index: 5, kind: input, shape index: {}]
  %s6 = inlined_call_operand.vmem [shape: f32[2,32,32], index: 6, kind: input, shape index: {}]
  %s7 = inlined_call_operand.vmem [shape: f32[2,1,32], index: 7, kind: input, shape index: {}]
  %s8 = inlined_call_operand.vmem [shape: f32[2,1,32], index: 8, kind: input, shape index: {}]
  %s9 = inlined_call_operand.vmem [shape: f32[2,1,32], index: 9, kind: input, shape index: {}]
  %s10 = inlined_call_operand.vmem [shape: f32[2,32,128], index: 10, kind: input, shape index: {}]
  %s11 = inlined_call_operand.vmem [shape: f32[2,1,128], index: 11, kind: input, shape index: {}]
  %s12 = inlined_call_operand.vmem [shape: f32[2,128,32], index: 12, kind: input, shape index: {}]
  %s13 = inlined_call_operand.vmem [shape: f32[2,1,32], index: 13, kind: input, shape index: {}]
  %s14 = inlined_call_operand.vmem [shape: f32[2,1,32], index: 14, kind: input, shape index: {}]
  %s15 = inlined_call_operand.vmem [shape: f32[2,1,32], index: 15, kind: input, shape index: {}]
  %s16 = inlined_call_operand.vmem [shape: f32[16,32], index: 16, kind: output, shape index: {}]
  %s17 = sld [smem:[#allocation0]]
  $region101: #{bert_forward.1} parent=0
    _
  %s19 = ssub.s32 1, %s17
  %s20 = scalar_select 0, %s19, %s17
  loop: start=0, step=1, limit=4
  $region2: #{bert_forward.1} parent=0 // loop_pre_header
    _
  $region3: #{bert_forward.1} parent=0 // loop_header
    %s22 = sphi 0, %s26
    %p23 = scmp.ge.s32.totalorder %s22, 4
    %s30 = sphi 0, %s30
    %s32 = sphi 0, %s30
    %s33 = sphi 0, %s32
    %s47 = sphi 0, %s33
    %s51 = sphi 0, %s51
    %s53 = sphi 0, %s51
    %s54 = sphi 0, %s53
    %s68 = sphi 0, %s54
    %s72 = sphi 0, %s72
    %s74 = sphi 0, %s72
    %s75 = sphi 0, %s74
    %s89 = sphi 0, %s75
    %s93 = sphi 0, %s93
    %s95 = sphi 0, %s93
    %s96 = sphi 0, %s95
    %s110 = sphi 0, %s96
    %s116 = sphi 0, %s118
    %s119 = sphi 0, %s116
    %s120 = sphi 0, %s119
    %s136 = sphi 0, %s120
    %s142 = sphi 0, %s144
    %s145 = sphi 0, %s142
    %s146 = sphi 0, %s145
    %s162 = sphi 0, %s146
    %s168 = sphi 0, %s170
    %s171 = sphi 0, %s168
    %s172 = sphi 0, %s171
    %s188 = sphi 0, %s172
    %s194 = sphi 0, %s196
    %s197 = sphi 0, %s194
    %s198 = sphi 0, %s197
    %s214 = sphi 0, %s198
    %s220 = sphi 0, %s222
    %s223 = sphi 0, %s220
    %s224 = sphi 0, %s223
    %s240 = sphi 0, %s224
    %s246 = sphi 0, %s248
    %s249 = sphi 0, %s246
    %s250 = sphi 0, %s249
    %s266 = sphi 0, %s250
    %s272 = sphi 0, %s274
    %s275 = sphi 0, %s272
    %s276 = sphi 0, %s275
    %s292 = sphi 0, %s276
    %s298 = sphi 0, %s300
    %s301 = sphi 0, %s298
    %s302 = sphi 0, %s301
    %s318 = sphi 0, %s302
    %s324 = sphi 0, %s326
    %s327 = sphi 0, %s324
    %s328 = sphi 0, %s327
    %s344 = sphi 0, %s328
    %s350 = sphi 0, %s352
    %s353 = sphi 0, %s350
    %s354 = sphi 0, %s353
    %s370 = sphi 0, %s354
    %s376 = sphi 0, %s378
    %s379 = sphi 0, %s376
    %s380 = sphi 0, %s379
    %s396 = sphi 0, %s380
    %s402 = sphi 0, %s404
    %s405 = sphi 0, %s402
    %s406 = sphi 0, %s405
    %s422 = sphi 0, %s406
    %s426 = sphi 0, %s426
    %s428 = sphi 0, %s426
    %s429 = sphi 0, %s428
    %s443 = sphi 0, %s429
  $region4: #{bert_forward.1} parent=0 // loop_header_branch
    %25 = sbr.rel (%p23) target = $region8
  $region5: #{bert_forward.1} parent=0 // loop_body
    %s27 = ssub.s32 %s22, 1
    %s28 = ssub.s32 %s22, 2
    %s29 = sadd.s32 %s22, 1
    %s31 = sadd.s32 %s30, 1
    %p34 = scmp.eq.s32.totalorder %s22, 1
    %p35 = scmp.ne.s32.totalorder %s30, %s32
    %p36 = scmp.eq.s32.totalorder %s22, 0
    %p37 = por %p35, %p36
    %p38 = scmp.ne.s32.totalorder %s30, %s32
    %p39 = scmp.eq.s32.totalorder %s27, 1
    %p40 = por %p38, %p39
    %p41 = scmp.ne.s32.totalorder %s32, %s33
    %p42 = scmp.eq.s32.totalorder %s27, 0
    %p43 = por %p41, %p42
    %p44 = scmp.ne.s32.totalorder %s32, %s33
    %p45 = scmp.eq.s32.totalorder %s28, 1
    %p46 = por %p44, %p45
    %p48 = scmp.ne.s32.totalorder %s33, %s47
    %p49 = scmp.eq.s32.totalorder %s28, 0
    %p50 = por %p48, %p49
    %s52 = sadd.s32 %s51, 1
    %p55 = scmp.eq.s32.totalorder %s22, 1
    %p56 = scmp.ne.s32.totalorder %s51, %s53
    %p57 = scmp.eq.s32.totalorder %s22, 0
    %p58 = por %p56, %p57
    %p59 = scmp.ne.s32.totalorder %s51, %s53
    %p60 = scmp.eq.s32.totalorder %s27, 1
    %p61 = por %p59, %p60
    %p62 = scmp.ne.s32.totalorder %s53, %s54
    %p63 = scmp.eq.s32.totalorder %s27, 0
    %p64 = por %p62, %p63
    %p65 = scmp.ne.s32.totalorder %s53, %s54
    %p66 = scmp.eq.s32.totalorder %s28, 1
    %p67 = por %p65, %p66
    %p69 = scmp.ne.s32.totalorder %s54, %s68
    %p70 = scmp.eq.s32.totalorder %s28, 0
    %p71 = por %p69, %p70
    %s73 = sadd.s32 %s72, 1
    %p76 = scmp.eq.s32.totalorder %s22, 1
    %p77 = scmp.ne.s32.totalorder %s72, %s74
    %p78 = scmp.eq.s32.totalorder %s22, 0
    %p79 = por %p77, %p78
    %p80 = scmp.ne.s32.totalorder %s72, %s74
    %p81 = scmp.eq.s32.totalorder %s27, 1
    %p82 = por %p80, %p81
    %p83 = scmp.ne.s32.totalorder %s74, %s75
    %p84 = scmp.eq.s32.totalorder %s27, 0
    %p85 = por %p83, %p84
    %p86 = scmp.ne.s32.totalorder %s74, %s75
    %p87 = scmp.eq.s32.totalorder %s28, 1
    %p88 = por %p86, %p87
    %p90 = scmp.ne.s32.totalorder %s75, %s89
    %p91 = scmp.eq.s32.totalorder %s28, 0
    %p92 = por %p90, %p91
    %s94 = sadd.s32 %s93, 1
    %p97 = scmp.eq.s32.totalorder %s22, 1
    %p98 = scmp.ne.s32.totalorder %s93, %s95
    %p99 = scmp.eq.s32.totalorder %s22, 0
    %p100 = por %p98, %p99
    %p101 = scmp.ne.s32.totalorder %s93, %s95
    %p102 = scmp.eq.s32.totalorder %s27, 1
    %p103 = por %p101, %p102
    %p104 = scmp.ne.s32.totalorder %s95, %s96
    %p105 = scmp.eq.s32.totalorder %s27, 0
    %p106 = por %p104, %p105
    %p107 = scmp.ne.s32.totalorder %s95, %s96
    %p108 = scmp.eq.s32.totalorder %s28, 1
    %p109 = por %p107, %p108
    %p111 = scmp.ne.s32.totalorder %s96, %s110
    %p112 = scmp.eq.s32.totalorder %s28, 0
    %p113 = por %p111, %p112
    %s114 = ssub.s32 %s22, %s29
    %p115 = scmp.eq.s32.totalorder %s114, 0
    %s117 = sadd.s32 %s116, 1
    %s118 = scalar_select %p115, %s116, %s117
    %p121 = pneg %p115
    %p122 = scmp.eq.s32.totalorder %s22, 1
    %p123 = por %p121, %p122
    %p124 = scmp.ne.s32.totalorder %s116, %s119
    %p125 = scmp.eq.s32.totalorder %s22, 0
    %p126 = por %p124, %p125
    %p127 = scmp.ne.s32.totalorder %s116, %s119
    %p128 = scmp.eq.s32.totalorder %s27, 1
    %p129 = por %p127, %p128
    %p130 = scmp.ne.s32.totalorder %s119, %s120
    %p131 = scmp.eq.s32.totalorder %s27, 0
    %p132 = por %p130, %p131
    %p133 = scmp.ne.s32.totalorder %s119, %s120
    %p134 = scmp.eq.s32.totalorder %s28, 1
    %p135 = por %p133, %p134
    %p137 = scmp.ne.s32.totalorder %s120, %s136
    %p138 = scmp.eq.s32.totalorder %s28, 0
    %p139 = por %p137, %p138
    %s140 = ssub.s32 %s22, %s29
    %p141 = scmp.eq.s32.totalorder %s140, 0
    %s143 = sadd.s32 %s142, 1
    %s144 = scalar_select %p141, %s142, %s143
    %p147 = pneg %p141
    %p148 = scmp.eq.s32.totalorder %s22, 1
    %p149 = por %p147, %p148
    %p150 = scmp.ne.s32.totalorder %s142, %s145
    %p151 = scmp.eq.s32.totalorder %s22, 0
    %p152 = por %p150, %p151
    %p153 = scmp.ne.s32.totalorder %s142, %s145
    %p154 = scmp.eq.s32.totalorder %s27, 1
    %p155 = por %p153, %p154
    %p156 = scmp.ne.s32.totalorder %s145, %s146
    %p157 = scmp.eq.s32.totalorder %s27, 0
    %p158 = por %p156, %p157
    %p159 = scmp.ne.s32.totalorder %s145, %s146
    %p160 = scmp.eq.s32.totalorder %s28, 1
    %p161 = por %p159, %p160
    %p163 = scmp.ne.s32.totalorder %s146, %s162
    %p164 = scmp.eq.s32.totalorder %s28, 0
    %p165 = por %p163, %p164
    %s166 = ssub.s32 %s22, %s29
    %p167 = scmp.eq.s32.totalorder %s166, 0
    %s169 = sadd.s32 %s168, 1
    %s170 = scalar_select %p167, %s168, %s169
    %p173 = pneg %p167
    %p174 = scmp.eq.s32.totalorder %s22, 1
    %p175 = por %p173, %p174
    %p176 = scmp.ne.s32.totalorder %s168, %s171
    %p177 = scmp.eq.s32.totalorder %s22, 0
    %p178 = por %p176, %p177
    %p179 = scmp.ne.s32.totalorder %s168, %s171
    %p180 = scmp.eq.s32.totalorder %s27, 1
    %p181 = por %p179, %p180
    %p182 = scmp.ne.s32.totalorder %s171, %s172
    %p183 = scmp.eq.s32.totalorder %s27, 0
    %p184 = por %p182, %p183
    %p185 = scmp.ne.s32.totalorder %s171, %s172
    %p186 = scmp.eq.s32.totalorder %s28, 1
    %p187 = por %p185, %p186
    %p189 = scmp.ne.s32.totalorder %s172, %s188
    %p190 = scmp.eq.s32.totalorder %s28, 0
    %p191 = por %p189, %p190
    %s192 = ssub.s32 %s22, %s29
    %p193 = scmp.eq.s32.totalorder %s192, 0
    %s195 = sadd.s32 %s194, 1
    %s196 = scalar_select %p193, %s194, %s195
    %p199 = pneg %p193
    %p200 = scmp.eq.s32.totalorder %s22, 1
    %p201 = por %p199, %p200
    %p202 = scmp.ne.s32.totalorder %s194, %s197
    %p203 = scmp.eq.s32.totalorder %s22, 0
    %p204 = por %p202, %p203
    %p205 = scmp.ne.s32.totalorder %s194, %s197
    %p206 = scmp.eq.s32.totalorder %s27, 1
    %p207 = por %p205, %p206
    %p208 = scmp.ne.s32.totalorder %s197, %s198
    %p209 = scmp.eq.s32.totalorder %s27, 0
    %p210 = por %p208, %p209
    %p211 = scmp.ne.s32.totalorder %s197, %s198
    %p212 = scmp.eq.s32.totalorder %s28, 1
    %p213 = por %p211, %p212
    %p215 = scmp.ne.s32.totalorder %s198, %s214
    %p216 = scmp.eq.s32.totalorder %s28, 0
    %p217 = por %p215, %p216
    %s218 = ssub.s32 %s22, %s29
    %p219 = scmp.eq.s32.totalorder %s218, 0
    %s221 = sadd.s32 %s220, 1
    %s222 = scalar_select %p219, %s220, %s221
    %p225 = pneg %p219
    %p226 = scmp.eq.s32.totalorder %s22, 1
    %p227 = por %p225, %p226
    %p228 = scmp.ne.s32.totalorder %s220, %s223
    %p229 = scmp.eq.s32.totalorder %s22, 0
    %p230 = por %p228, %p229
    %p231 = scmp.ne.s32.totalorder %s220, %s223
    %p232 = scmp.eq.s32.totalorder %s27, 1
    %p233 = por %p231, %p232
    %p234 = scmp.ne.s32.totalorder %s223, %s224
    %p235 = scmp.eq.s32.totalorder %s27, 0
    %p236 = por %p234, %p235
    %p237 = scmp.ne.s32.totalorder %s223, %s224
    %p238 = scmp.eq.s32.totalorder %s28, 1
    %p239 = por %p237, %p238
    %p241 = scmp.ne.s32.totalorder %s224, %s240
    %p242 = scmp.eq.s32.totalorder %s28, 0
    %p243 = por %p241, %p242
    %s244 = ssub.s32 %s22, %s29
    %p245 = scmp.eq.s32.totalorder %s244, 0
    %s247 = sadd.s32 %s246, 1
    %s248 = scalar_select %p245, %s246, %s247
    %p251 = pneg %p245
    %p252 = scmp.eq.s32.totalorder %s22, 1
    %p253 = por %p251, %p252
    %p254 = scmp.ne.s32.totalorder %s246, %s249
    %p255 = scmp.eq.s32.totalorder %s22, 0
    %p256 = por %p254, %p255
    %p257 = scmp.ne.s32.totalorder %s246, %s249
    %p258 = scmp.eq.s32.totalorder %s27, 1
    %p259 = por %p257, %p258
    %p260 = scmp.ne.s32.totalorder %s249, %s250
    %p261 = scmp.eq.s32.totalorder %s27, 0
    %p262 = por %p260, %p261
    %p263 = scmp.ne.s32.totalorder %s249, %s250
    %p264 = scmp.eq.s32.totalorder %s28, 1
    %p265 = por %p263, %p264
    %p267 = scmp.ne.s32.totalorder %s250, %s266
    %p268 = scmp.eq.s32.totalorder %s28, 0
    %p269 = por %p267, %p268
    %s270 = ssub.s32 %s22, %s29
    %p271 = scmp.eq.s32.totalorder %s270, 0
    %s273 = sadd.s32 %s272, 1
    %s274 = scalar_select %p271, %s272, %s273
    %p277 = pneg %p271
    %p278 = scmp.eq.s32.totalorder %s22, 1
    %p279 = por %p277, %p278
    %p280 = scmp.ne.s32.totalorder %s272, %s275
    %p281 = scmp.eq.s32.totalorder %s22, 0
    %p282 = por %p280, %p281
    %p283 = scmp.ne.s32.totalorder %s272, %s275
    %p284 = scmp.eq.s32.totalorder %s27, 1
    %p285 = por %p283, %p284
    %p286 = scmp.ne.s32.totalorder %s275, %s276
    %p287 = scmp.eq.s32.totalorder %s27, 0
    %p288 = por %p286, %p287
    %p289 = scmp.ne.s32.totalorder %s275, %s276
    %p290 = scmp.eq.s32.totalorder %s28, 1
    %p291 = por %p289, %p290
    %p293 = scmp.ne.s32.totalorder %s276, %s292
    %p294 = scmp.eq.s32.totalorder %s28, 0
    %p295 = por %p293, %p294
    %s296 = ssub.s32 %s22, %s29
    %p297 = scmp.eq.s32.totalorder %s296, 0
    %s299 = sadd.s32 %s298, 1
    %s300 = scalar_select %p297, %s298, %s299
    %p303 = pneg %p297
    %p304 = scmp.eq.s32.totalorder %s22, 1
    %p305 = por %p303, %p304
    %p306 = scmp.ne.s32.totalorder %s298, %s301
    %p307 = scmp.eq.s32.totalorder %s22, 0
    %p308 = por %p306, %p307
    %p309 = scmp.ne.s32.totalorder %s298, %s301
    %p310 = scmp.eq.s32.totalorder %s27, 1
    %p311 = por %p309, %p310
    %p312 = scmp.ne.s32.totalorder %s301, %s302
    %p313 = scmp.eq.s32.totalorder %s27, 0
    %p314 = por %p312, %p313
    %p315 = scmp.ne.s32.totalorder %s301, %s302
    %p316 = scmp.eq.s32.totalorder %s28, 1
    %p317 = por %p315, %p316
    %p319 = scmp.ne.s32.totalorder %s302, %s318
    %p320 = scmp.eq.s32.totalorder %s28, 0
    %p321 = por %p319, %p320
    %s322 = ssub.s32 %s22, %s29
    %p323 = scmp.eq.s32.totalorder %s322, 0
    %s325 = sadd.s32 %s324, 1
    %s326 = scalar_select %p323, %s324, %s325
    %p329 = pneg %p323
    %p330 = scmp.eq.s32.totalorder %s22, 1
    %p331 = por %p329, %p330
    %p332 = scmp.ne.s32.totalorder %s324, %s327
    %p333 = scmp.eq.s32.totalorder %s22, 0
    %p334 = por %p332, %p333
    %p335 = scmp.ne.s32.totalorder %s324, %s327
    %p336 = scmp.eq.s32.totalorder %s27, 1
    %p337 = por %p335, %p336
    %p338 = scmp.ne.s32.totalorder %s327, %s328
    %p339 = scmp.eq.s32.totalorder %s27, 0
    %p340 = por %p338, %p339
    %p341 = scmp.ne.s32.totalorder %s327, %s328
    %p342 = scmp.eq.s32.totalorder %s28, 1
    %p343 = por %p341, %p342
    %p345 = scmp.ne.s32.totalorder %s328, %s344
    %p346 = scmp.eq.s32.totalorder %s28, 0
    %p347 = por %p345, %p346
    %s348 = ssub.s32 %s22, %s29
    %p349 = scmp.eq.s32.totalorder %s348, 0
    %s351 = sadd.s32 %s350, 1
    %s352 = scalar_select %p349, %s350, %s351
    %p355 = pneg %p349
    %p356 = scmp.eq.s32.totalorder %s22, 1
    %p357 = por %p355, %p356
    %p358 = scmp.ne.s32.totalorder %s350, %s353
    %p359 = scmp.eq.s32.totalorder %s22, 0
    %p360 = por %p358, %p359
    %p361 = scmp.ne.s32.totalorder %s350, %s353
    %p362 = scmp.eq.s32.totalorder %s27, 1
    %p363 = por %p361, %p362
    %p364 = scmp.ne.s32.totalorder %s353, %s354
    %p365 = scmp.eq.s32.totalorder %s27, 0
    %p366 = por %p364, %p365
    %p367 = scmp.ne.s32.totalorder %s353, %s354
    %p368 = scmp.eq.s32.totalorder %s28, 1
    %p369 = por %p367, %p368
    %p371 = scmp.ne.s32.totalorder %s354, %s370
    %p372 = scmp.eq.s32.totalorder %s28, 0
    %p373 = por %p371, %p372
    %s374 = ssub.s32 %s22, %s29
    %p375 = scmp.eq.s32.totalorder %s374, 0
    %s377 = sadd.s32 %s376, 1
    %s378 = scalar_select %p375, %s376, %s377
    %p381 = pneg %p375
    %p382 = scmp.eq.s32.totalorder %s22, 1
    %p383 = por %p381, %p382
    %p384 = scmp.ne.s32.totalorder %s376, %s379
    %p385 = scmp.eq.s32.totalorder %s22, 0
    %p386 = por %p384, %p385
    %p387 = scmp.ne.s32.totalorder %s376, %s379
    %p388 = scmp.eq.s32.totalorder %s27, 1
    %p389 = por %p387, %p388
    %p390 = scmp.ne.s32.totalorder %s379, %s380
    %p391 = scmp.eq.s32.totalorder %s27, 0
    %p392 = por %p390, %p391
    %p393 = scmp.ne.s32.totalorder %s379, %s380
    %p394 = scmp.eq.s32.totalorder %s28, 1
    %p395 = por %p393, %p394
    %p397 = scmp.ne.s32.totalorder %s380, %s396
    %p398 = scmp.eq.s32.totalorder %s28, 0
    %p399 = por %p397, %p398
    %s400 = ssub.s32 %s22, %s29
    %p401 = scmp.eq.s32.totalorder %s400, 0
    %s403 = sadd.s32 %s402, 1
    %s404 = scalar_select %p401, %s402, %s403
    %p407 = pneg %p401
    %p408 = scmp.eq.s32.totalorder %s22, 1
    %p409 = por %p407, %p408
    %p410 = scmp.ne.s32.totalorder %s402, %s405
    %p411 = scmp.eq.s32.totalorder %s22, 0
    %p412 = por %p410, %p411
    %p413 = scmp.ne.s32.totalorder %s402, %s405
    %p414 = scmp.eq.s32.totalorder %s27, 1
    %p415 = por %p413, %p414
    %p416 = scmp.ne.s32.totalorder %s405, %s406
    %p417 = scmp.eq.s32.totalorder %s27, 0
    %p418 = por %p416, %p417
    %p419 = scmp.ne.s32.totalorder %s405, %s406
    %p420 = scmp.eq.s32.totalorder %s28, 1
    %p421 = por %p419, %p420
    %p423 = scmp.ne.s32.totalorder %s406, %s422
    %p424 = scmp.eq.s32.totalorder %s28, 0
    %p425 = por %p423, %p424
    %s427 = sadd.s32 %s426, 1
    %p430 = scmp.eq.s32.totalorder %s22, 1
    %p431 = scmp.ne.s32.totalorder %s426, %s428
    %p432 = scmp.eq.s32.totalorder %s22, 0
    %p433 = por %p431, %p432
    %p434 = scmp.ne.s32.totalorder %s426, %s428
    %p435 = scmp.eq.s32.totalorder %s27, 1
    %p436 = por %p434, %p435
    %p437 = scmp.ne.s32.totalorder %s428, %s429
    %p438 = scmp.eq.s32.totalorder %s27, 0
    %p439 = por %p437, %p438
    %p440 = scmp.ne.s32.totalorder %s428, %s429
    %p441 = scmp.eq.s32.totalorder %s28, 1
    %p442 = por %p440, %p441
    %p444 = scmp.ne.s32.totalorder %s429, %s443
    %p445 = scmp.eq.s32.totalorder %s28, 0
    %p446 = por %p444, %p445
    %p447 = scmp.le.s32.totalorder 1, %s22
    %p448 = scmp.lt.s32.totalorder %s22, 3
    %p449 = pnand %p447, %p448
    %p450 = pneg %p449
    // Predicated region
    $region9: #{bert_forward.1} parent=5 // pred_check
      _
    $region10: #{bert_forward.1} parent=5 // pred_check_branch
      %452 = sbr.rel (%p449) target = $region12
    $region11: #{bert_forward.1} parent=5 // pred_region
      %s453 = ssub.s32 %s22, 1
      // Predicated region
      $region13: #{bert_forward.1} parent=11 // pred_check
        %p454 = pneg %p43
      $region14: #{bert_forward.1} parent=11 // pred_check_branch
        %456 = sbr.rel (%p454) target = $region16
      $region15: #{bert_forward.1} parent=11 // pred_region
        _
      $region16: #{bert_forward.1} parent=11 // pred_fallthru
        _
      // Predicated region
      $region17: #{bert_forward.1} parent=11 // pred_check
        %p457 = pneg %p64
      $region18: #{bert_forward.1} parent=11 // pred_check_branch
        %459 = sbr.rel (%p457) target = $region20
      $region19: #{bert_forward.1} parent=11 // pred_region
        _
      $region20: #{bert_forward.1} parent=11 // pred_fallthru
        _
      // Predicated region
      $region21: #{bert_forward.1} parent=11 // pred_check
        %p460 = pneg %p85
      $region22: #{bert_forward.1} parent=11 // pred_check_branch
        %462 = sbr.rel (%p460) target = $region24
      $region23: #{bert_forward.1} parent=11 // pred_region
        _
      $region24: #{bert_forward.1} parent=11 // pred_fallthru
        _
      // Predicated region
      $region25: #{bert_forward.1} parent=11 // pred_check
        %p463 = pneg %p106
      $region26: #{bert_forward.1} parent=11 // pred_check_branch
        %465 = sbr.rel (%p463) target = $region28
      $region27: #{bert_forward.1} parent=11 // pred_region
        _
      $region28: #{bert_forward.1} parent=11 // pred_fallthru
        _
    $region12: #{bert_forward.1} parent=5 // pred_fallthru
      _
    %p466 = scmp.lt.s32.totalorder %s22, 2
    // Predicated region
    $region29: #{bert_forward.1} parent=5 // pred_check
      %p467 = pneg %p466
    $region30: #{bert_forward.1} parent=5 // pred_check_branch
      %469 = sbr.rel (%p467) target = $region32
    $region31: #{bert_forward.1} parent=5 // pred_region
      // Predicated region
      $region33: #{bert_forward.1} parent=31 // pred_check
        %p470 = pneg %p126
      $region34: #{bert_forward.1} parent=31 // pred_check_branch
        %472 = sbr.rel (%p470) target = $region36
      $region35: #{bert_forward.1} parent=31 // pred_region
        %p473 = scmp.lt.s32.totalorder %s22, 1
        %s474 = scalar_select %p473, %s22, 1
        %s475 = smul.addr %s474, 4
        %s476 = smul.addr %s475, 8
        %s477 = scalar_lea.vmem %s4, %s476
      $region36: #{bert_forward.1} parent=31 // pred_fallthru
        _
      // Predicated region
      $region37: #{bert_forward.1} parent=31 // pred_check
        %p478 = pneg %p152
      $region38: #{bert_forward.1} parent=31 // pred_check_branch
        %480 = sbr.rel (%p478) target = $region40
      $region39: #{bert_forward.1} parent=31 // pred_region
        %p481 = scmp.lt.s32.totalorder %s22, 1
        %s482 = scalar_select %p481, %s22, 1
        %s483 = scalar_lea.vmem %s5, %s482
      $region40: #{bert_forward.1} parent=31 // pred_fallthru
        _
      // Predicated region
      $region41: #{bert_forward.1} parent=31 // pred_check
        %p484 = pneg %p178
      $region42: #{bert_forward.1} parent=31 // pred_check_branch
        %486 = sbr.rel (%p484) target = $region44
      $region43: #{bert_forward.1} parent=31 // pred_region
        %p487 = scmp.lt.s32.totalorder %s22, 1
        %s488 = scalar_select %p487, %s22, 1
        %s489 = smul.addr %s488, 4
        %s490 = smul.addr %s489, 8
        %s491 = scalar_lea.vmem %s6, %s490
      $region44: #{bert_forward.1} parent=31 // pred_fallthru
        _
      // Predicated region
      $region45: #{bert_forward.1} parent=31 // pred_check
        %p492 = pneg %p204
      $region46: #{bert_forward.1} parent=31 // pred_check_branch
        %494 = sbr.rel (%p492) target = $region48
      $region47: #{bert_forward.1} parent=31 // pred_region
        %p495 = scmp.lt.s32.totalorder %s22, 1
        %s496 = scalar_select %p495, %s22, 1
        %s497 = scalar_lea.vmem %s7, %s496
      $region48: #{bert_forward.1} parent=31 // pred_fallthru
        _
      // Predicated region
      $region49: #{bert_forward.1} parent=31 // pred_check
        %p498 = pneg %p230
      $region50: #{bert_forward.1} parent=31 // pred_check_branch
        %500 = sbr.rel (%p498) target = $region52
      $region51: #{bert_forward.1} parent=31 // pred_region
        %p501 = scmp.lt.s32.totalorder %s22, 1
        %s502 = scalar_select %p501, %s22, 1
        %s503 = scalar_lea.vmem %s8, %s502
      $region52: #{bert_forward.1} parent=31 // pred_fallthru
        _
      // Predicated region
      $region53: #{bert_forward.1} parent=31 // pred_check
        %p504 = pneg %p256
      $region54: #{bert_forward.1} parent=31 // pred_check_branch
        %506 = sbr.rel (%p504) target = $region56
      $region55: #{bert_forward.1} parent=31 // pred_region
        %p507 = scmp.lt.s32.totalorder %s22, 1
        %s508 = scalar_select %p507, %s22, 1
        %s509 = scalar_lea.vmem %s9, %s508
      $region56: #{bert_forward.1} parent=31 // pred_fallthru
        _
      // Predicated region
      $region57: #{bert_forward.1} parent=31 // pred_check
        %p510 = pneg %p282
      $region58: #{bert_forward.1} parent=31 // pred_check_branch
        %512 = sbr.rel (%p510) target = $region60
      $region59: #{bert_forward.1} parent=31 // pred_region
        %p513 = scmp.lt.s32.totalorder %s22, 1
        %s514 = scalar_select %p513, %s22, 1
        %s515 = smul.addr %s514, 4
        %s516 = smul.addr %s515, 8
        %s517 = scalar_lea.vmem %s10, %s516
      $region60: #{bert_forward.1} parent=31 // pred_fallthru
        _
      // Predicated region
      $region61: #{bert_forward.1} parent=31 // pred_check
        %p518 = pneg %p308
      $region62: #{bert_forward.1} parent=31 // pred_check_branch
        %520 = sbr.rel (%p518) target = $region64
      $region63: #{bert_forward.1} parent=31 // pred_region
        %p521 = scmp.lt.s32.totalorder %s22, 1
        %s522 = scalar_select %p521, %s22, 1
        %s523 = scalar_lea.vmem %s11, %s522
      $region64: #{bert_forward.1} parent=31 // pred_fallthru
        _
      // Predicated region
      $region65: #{bert_forward.1} parent=31 // pred_check
        %p524 = pneg %p334
      $region66: #{bert_forward.1} parent=31 // pred_check_branch
        %526 = sbr.rel (%p524) target = $region68
      $region67: #{bert_forward.1} parent=31 // pred_region
        %p527 = scmp.lt.s32.totalorder %s22, 1
        %s528 = scalar_select %p527, %s22, 1
        %s529 = smul.addr %s528, 16
        %s530 = smul.addr %s529, 8
        %s531 = scalar_lea.vmem %s12, %s530
      $region68: #{bert_forward.1} parent=31 // pred_fallthru
        _
      // Predicated region
      $region69: #{bert_forward.1} parent=31 // pred_check
        %p532 = pneg %p360
      $region70: #{bert_forward.1} parent=31 // pred_check_branch
        %534 = sbr.rel (%p532) target = $region72
      $region71: #{bert_forward.1} parent=31 // pred_region
        %p535 = scmp.lt.s32.totalorder %s22, 1
        %s536 = scalar_select %p535, %s22, 1
        %s537 = scalar_lea.vmem %s13, %s536
      $region72: #{bert_forward.1} parent=31 // pred_fallthru
        _
      // Predicated region
      $region73: #{bert_forward.1} parent=31 // pred_check
        %p538 = pneg %p386
      $region74: #{bert_forward.1} parent=31 // pred_check_branch
        %540 = sbr.rel (%p538) target = $region76
      $region75: #{bert_forward.1} parent=31 // pred_region
        %p541 = scmp.lt.s32.totalorder %s22, 1
        %s542 = scalar_select %p541, %s22, 1
        %s543 = scalar_lea.vmem %s14, %s542
      $region76: #{bert_forward.1} parent=31 // pred_fallthru
        _
      // Predicated region
      $region77: #{bert_forward.1} parent=31 // pred_check
        %p544 = pneg %p412
      $region78: #{bert_forward.1} parent=31 // pred_check_branch
        %546 = sbr.rel (%p544) target = $region80
      $region79: #{bert_forward.1} parent=31 // pred_region
        %p547 = scmp.lt.s32.totalorder %s22, 1
        %s548 = scalar_select %p547, %s22, 1
        %s549 = scalar_lea.vmem %s15, %s548
      $region80: #{bert_forward.1} parent=31 // pred_fallthru
        _
    $region32: #{bert_forward.1} parent=5 // pred_fallthru
      _
    %p550 = scmp.le.s32.totalorder 1, %s22
    %p551 = scmp.lt.s32.totalorder %s22, 3
    %p552 = pnand %p550, %p551
    %p553 = pneg %p552
    // Predicated region
    $region81: #{bert_forward.1} parent=5 // pred_check
      _
    $region82: #{bert_forward.1} parent=5 // pred_check_branch
      %555 = sbr.rel (%p552) target = $region84
    $region83: #{bert_forward.1} parent=5 // pred_region
      %s556 = ssub.s32 %s22, 1
      %p557 = pneg %p43
      %p558 = pneg %p40
      %p559 = pneg %p64
      %p560 = pneg %p61
      %p561 = pneg %p85
      %p562 = pneg %p82
      %p563 = pneg %p106
      %p564 = pneg %p103
      %p565 = scmp.lt.s32.totalorder %s27, 1
      %s566 = scalar_select %p565, %s27, 1
      %s567 = smul.addr %s566, 4
      %s568 = smul.addr %s567, 8
      %s569 = scalar_lea.vmem %s4, %s568
      %p570 = pneg %p132
      %p571 = pneg %p129
      %p572 = scmp.lt.s32.totalorder %s27, 1
      %s573 = scalar_select %p572, %s27, 1
      %s574 = scalar_lea.vmem %s5, %s573
      %p575 = pneg %p158
      %p576 = pneg %p155
      %p577 = scmp.lt.s32.totalorder %s27, 1
      %s578 = scalar_select %p577, %s27, 1
      %s579 = smul.addr %s578, 4
      %s580 = smul.addr %s579, 8
      %s581 = scalar_lea.vmem %s6, %s580
      %p582 = pneg %p184
      %p583 = pneg %p181
      %p584 = scmp.lt.s32.totalorder %s27, 1
      %s585 = scalar_select %p584, %s27, 1
      %s586 = scalar_lea.vmem %s7, %s585
      %p587 = pneg %p210
      %p588 = pneg %p207
      %p589 = scmp.lt.s32.totalorder %s27, 1
      %s590 = scalar_select %p589, %s27, 1
      %s591 = scalar_lea.vmem %s8, %s590
      %p592 = pneg %p236
      %p593 = pneg %p233
      %p594 = scmp.lt.s32.totalorder %s27, 1
      %s595 = scalar_select %p594, %s27, 1
      %s596 = scalar_lea.vmem %s9, %s595
      %p597 = pneg %p262
      %p598 = pneg %p259
      %p599 = scmp.lt.s32.totalorder %s27, 1
      %s600 = scalar_select %p599, %s27, 1
      %s601 = smul.addr %s600, 4
      %s602 = smul.addr %s601, 8
      %s603 = scalar_lea.vmem %s10, %s602
      %p604 = pneg %p288
      %p605 = pneg %p285
      %p606 = scmp.lt.s32.totalorder %s27, 1
      %s607 = scalar_select %p606, %s27, 1
      %s608 = scalar_lea.vmem %s11, %s607
      %p609 = pneg %p314
      %p610 = pneg %p311
      %p611 = scmp.lt.s32.totalorder %s27, 1
      %s612 = scalar_select %p611, %s27, 1
      %s613 = smul.addr %s612, 16
      %s614 = smul.addr %s613, 8
      %s615 = scalar_lea.vmem %s12, %s614
      %p616 = pneg %p340
      %p617 = pneg %p337
      %p618 = scmp.lt.s32.totalorder %s27, 1
      %s619 = scalar_select %p618, %s27, 1
      %s620 = scalar_lea.vmem %s13, %s619
      %p621 = pneg %p366
      %p622 = pneg %p363
      %p623 = scmp.lt.s32.totalorder %s27, 1
      %s624 = scalar_select %p623, %s27, 1
      %s625 = scalar_lea.vmem %s14, %s624
      %p626 = pneg %p392
      %p627 = pneg %p389
      %p628 = scmp.lt.s32.totalorder %s27, 1
      %s629 = scalar_select %p628, %s27, 1
      %s630 = scalar_lea.vmem %s15, %s629
      %p631 = pneg %p418
      %p632 = pneg %p415
      %p633 = pneg %p439
      %p634 = pneg %p436
      %p635 = scmp.lt.s32.totalorder %s27, 1
      %s636 = scalar_select %p635, %s27, 1
      %s637 = smul.addr %s636, 4
      %s638 = smul.addr %s637, 8
      %s639 = scalar_lea.vmem %s4, %s638
      %p640 = scmp.lt.s32.totalorder %s27, 1
      %s641 = scalar_select %p640, %s27, 1
      %s642 = scalar_lea.vmem %s5, %s641
      %p643 = scmp.lt.s32.totalorder %s27, 1
      %s644 = scalar_select %p643, %s27, 1
      %s645 = smul.addr %s644, 4
      %s646 = smul.addr %s645, 8
      %s647 = scalar_lea.vmem %s6, %s646
      %p648 = scmp.lt.s32.totalorder %s27, 1
      %s649 = scalar_select %p648, %s27, 1
      %s650 = scalar_lea.vmem %s7, %s649
      %p651 = scmp.lt.s32.totalorder %s27, 1
      %s652 = scalar_select %p651, %s27, 1
      %s653 = scalar_lea.vmem %s8, %s652
      %p654 = scmp.lt.s32.totalorder %s27, 1
      %s655 = scalar_select %p654, %s27, 1
      %s656 = scalar_lea.vmem %s9, %s655
      %p657 = scmp.lt.s32.totalorder %s27, 1
      %s658 = scalar_select %p657, %s27, 1
      %s659 = smul.addr %s658, 4
      %s660 = smul.addr %s659, 8
      %s661 = scalar_lea.vmem %s10, %s660
      %p662 = scmp.lt.s32.totalorder %s27, 1
      %s663 = scalar_select %p662, %s27, 1
      %s664 = scalar_lea.vmem %s11, %s663
      %p665 = scmp.lt.s32.totalorder %s27, 1
      %s666 = scalar_select %p665, %s27, 1
      %s667 = smul.addr %s666, 16
      %s668 = smul.addr %s667, 8
      %s669 = scalar_lea.vmem %s12, %s668
      %p670 = scmp.lt.s32.totalorder %s27, 1
      %s671 = scalar_select %p670, %s27, 1
      %s672 = scalar_lea.vmem %s13, %s671
      %p673 = scmp.lt.s32.totalorder %s27, 1
      %s674 = scalar_select %p673, %s27, 1
      %s675 = scalar_lea.vmem %s14, %s674
      %p676 = scmp.lt.s32.totalorder %s27, 1
      %s677 = scalar_select %p676, %s27, 1
      %s678 = scalar_lea.vmem %s15, %s677
      %p679 = scmp.eq.s32.totalorder %s27, 0
      // Predicated region
      $region85: #{bert_forward.1} parent=83 // pred_check
        %p680 = pneg %p679
      $region86: #{bert_forward.1} parent=83 // pred_check_branch
        %682 = sbr.rel (%p680) target = $region88
      $region87: #{bert_forward.1} parent=83 // pred_region
        %v683 = vld [vmem:[%s1] sm:$0xff]
        %v684 = vld [vmem:[%s1 + $0x8] sm:$0xff]
        %v685 = vld [vmem:[%s2] sm:$0x1]
        %v686 = vld [vmem:[%s3] sm:$0x1]
        %vm687 = vcmask 261120
        %v688 = vsel %vm687, %v683, 0.0
        %689 = vadd.xlane.f32.xlu0 %v688
        %v690 = vpop.xlane.xlu0 %689
        %v691 = vsel %vm687, %v684, 0.0
        %692 = vadd.xlane.f32.xlu0 %v691
        %v693 = vpop.xlane.xlu0 %692
        %v694 = vrcp.pop 32.0
        %v695 = vmul.f32 32.0, %v694
        %v696 = vsub.f32 1.0, %v695
        %v697 = vmul.f32 %v694, %v696
        %v698 = vadd.f32 %v694, %v697
        %vm699 = vweird.f32 %v694
        %v700 = vsel %vm699, %v694, %v698
        %v701 = vmul.f32 %v690, %v700
        %v702 = vmul.f32 %v693, %v700
        %v703 = vsub.f32 %v683, %v701
        %v704 = vsub.f32 %v684, %v702
        %v705 = vmul.f32 %v703, %v703
        %v706 = vmul.f32 %v704, %v704
        %v707 = vsel %vm687, %v705, 0.0
        %708 = vadd.xlane.f32.xlu0 %v707
        %v709 = vpop.xlane.xlu0 %708
        %v710 = vsel %vm687, %v706, 0.0
        %711 = vadd.xlane.f32.xlu0 %v710
        %v712 = vpop.xlane.xlu0 %711
        %v713 = vmul.f32 %v709, %v700
        %v714 = vmul.f32 %v712, %v700
        %v715 = vadd.f32 %v713, 1e-12
        %v716 = vadd.f32 %v714, 1e-12
        %v717 = vrsqrt.pop %v715
        %v718 = vmul.f32 %v717, %v715
        %v719 = vmul.f32 %v718, %v717
        %v720 = vmul.f32 0.5, %v719
        %v721 = vsub.f32 1.5, %v720
        %v722 = vmul.f32 %v717, %v721
        %vm723 = vweird.f32 %v715
        %vm724 = vweird.f32 %v717
        %vm725 = vmor %vm723, %vm724
        %v726 = vsel %vm725, %v717, %v722
        %v727 = vrsqrt.pop %v716
        %v728 = vmul.f32 %v727, %v716
        %v729 = vmul.f32 %v728, %v727
        %v730 = vmul.f32 0.5, %v729
        %v731 = vsub.f32 1.5, %v730
        %v732 = vmul.f32 %v727, %v731
        %vm733 = vweird.f32 %v716
        %vm734 = vweird.f32 %v727
        %vm735 = vmor %vm733, %vm734
        %v736 = vsel %vm735, %v727, %v732
        %v737 = vmul.f32 %v703, %v726
        %v738 = vmul.f32 %v704, %v736
        %v740 = vperm.slane %v685, 0
        %v742 = vmul.f32 %v737, %v740
        %v743 = vmul.f32 %v738, %v740
        %v745 = vperm.slane %v686, 0
        %v747 = vadd.f32 %v742, %v745
        %v748 = vadd.f32 %v743, %v745
        %749 = vst.msk [vmem:[%s16] sm:$0xff] %vm687, %v747
        %750 = vst.msk [vmem:[%s16 + $0x8] sm:$0xff] %vm687, %v748
      $region88: #{bert_forward.1} parent=83 // pred_fallthru
        _
      %v751 = vld [vmem:[%s16] sm:$0xff]
      %v752 = vld [vmem:[%s16 + $0x8] sm:$0xff]
      %v753 = vld [vmem:[%s639] sm:$0xff]
      %v754 = vld [vmem:[%s639 + $0x8] sm:$0xff]
      %v755 = vld [vmem:[%s639 + $0x10] sm:$0xff]
      %v756 = vld [vmem:[%s639 + $0x18] sm:$0xff]
      %v757 = vld [vmem:[%s642] sm:$0x1]
      %v759 = vperm.slane %v757, 0
      %vm761 = vcmask 261120
      %v763 = vsel %vm761, %v751, 0
      %v766 = vsel %vm761, %v752, 0
      %768 = vmatpush.msra.mxu0 0.0
      %769 = vmatpush.msra.mxu0 0.0
      %770 = vmatpush.msra.mxu0 0.0
      %771 = vmatpush.msra.mxu0 0.0
      %772 = vmatpush.msra.mxu0 0.0
      %773 = vmatpush.msra.mxu0 0.0
      %774 = vmatpush.msra.mxu0 0.0
      %775 = vmatpush.msra.mxu0 0.0
      %776 = vmatpush.msra.mxu0 0.0
      %777 = vmatpush.msra.mxu0 0.0
      %778 = vmatpush.msra.mxu0 0.0
      %779 = vmatpush.msra.mxu0 0.0
      %780 = vmatpush.msra.mxu0 %v756
      %781 = vmatpush.msra.mxu0 %v755
      %782 = vmatpush.msra.mxu0 %v754
      %783 = vmatpush.msra.mxu0 %v753
      %784 = vmatmul.f32.gmra.mxu0 %v763
      %v785 = vpop.f32.mrf.mxu0
      %v786 = vadd.f32 %v759, %v785
      %787 = vmatmul.f32.gmra.mxu0 %v766
      %v788 = vpop.f32.mrf.mxu0
      %v789 = vadd.f32 %v759, %v788
      %790 = vdwg.mxu0
      %v791 = vld [vmem:[%s647] sm:$0xff]
      %v792 = vld [vmem:[%s647 + $0x8] sm:$0xff]
      %v793 = vld [vmem:[%s647 + $0x10] sm:$0xff]
      %v794 = vld [vmem:[%s647 + $0x18] sm:$0xff]
      %v795 = vld [vmem:[%s0] sm:$0x1]
      %v796 = vld [vmem:[%s0 + $0x1] sm:$0x1]
      %798 = vrot.lane.b32.xlu0 %v786, 96
      %v799 = vpop.permute.xlu0 %798
      %vm800 = vcmask 130048
      %v801 = vsel %vm800, %v786, 0
      %v803 = vsel %vm800, %v799, 0
      %805 = vmatpush.xpose.msra.mxu0 0.0
      %806 = vmatpush.xpose.msra.mxu0 0.0
      %807 = vmatpush.xpose.msra.mxu0 0.0
      %808 = vmatpush.xpose.msra.mxu0 0.0
      %809 = vmatpush.xpose.msra.mxu0 0.0
      %810 = vmatpush.xpose.msra.mxu0 0.0
      %811 = vmatpush.xpose.msra.mxu0 0.0
      %812 = vmatpush.xpose.msra.mxu0 0.0
      %813 = vmatpush.xpose.msra.mxu0 0.0
      %814 = vmatpush.xpose.msra.mxu0 0.0
      %815 = vmatpush.xpose.msra.mxu0 0.0
      %816 = vmatpush.xpose.msra.mxu0 0.0
      %817 = vmatpush.xpose.msra.mxu0 0.0
      %818 = vmatpush.xpose.msra.mxu0 0.0
      %819 = vmatpush.xpose.msra.mxu0 0.0
      %820 = vmatpush.xpose.msra.mxu0 %v803
      %821 = vmatmul.f32.gmra.mxu0 %v801
      %v822 = vpop.f32.mrf.mxu0
      %v823 = vadd.f32 0.0, %v822
      %824 = vdwg.mxu0
      %826 = vrot.lane.b32.xlu0 %v789, 96
      %v827 = vpop.permute.xlu0 %826
      %v828 = vsel %vm800, %v789, 0
      %v830 = vsel %vm800, %v827, 0
      %832 = vmatpush.xpose.msra.mxu0 0.0
      %833 = vmatpush.xpose.msra.mxu0 0.0
      %834 = vmatpush.xpose.msra.mxu0 0.0
      %835 = vmatpush.xpose.msra.mxu0 0.0
      %836 = vmatpush.xpose.msra.mxu0 0.0
      %837 = vmatpush.xpose.msra.mxu0 0.0
      %838 = vmatpush.xpose.msra.mxu0 0.0
      %839 = vmatpush.xpose.msra.mxu0 0.0
      %840 = vmatpush.xpose.msra.mxu0 0.0
      %841 = vmatpush.xpose.msra.mxu0 0.0
      %842 = vmatpush.xpose.msra.mxu0 0.0
      %843 = vmatpush.xpose.msra.mxu0 0.0
      %844 = vmatpush.xpose.msra.mxu0 0.0
      %845 = vmatpush.xpose.msra.mxu0 0.0
      %846 = vmatpush.xpose.msra.mxu0 0.0
      %847 = vmatpush.xpose.msra.mxu0 %v830
      %848 = vmatmul.f32.gmra.mxu0 %v828
      %v849 = vpop.f32.mrf.mxu0
      %v850 = vadd.f32 0.0, %v849
      %851 = vdwg.mxu0
      %v852 = vmul.f32 %v823, 0.25
      %v853 = vmul.f32 %v850, 0.25
      %v856 = vperm.slane %v795, 0
      %v857 = vperm.slane %v796, 0
      %v860 = vadd.f32 %v852, %v856
      %v861 = vadd.f32 %v853, %v857
      %vm862 = vcmask 64512
      %v863 = vsel %vm862, %v860, -inf
      %864 = vmax.xlane.f32.xlu0 %v863
      %v865 = vpop.xlane.xlu0 %864
      %v866 = vsel %vm862, %v861, -inf
      %867 = vmax.xlane.f32.xlu0 %v866
      %v868 = vpop.xlane.xlu0 %867
      %v869 = vsub.f32 %v860, %v865
      %v870 = vsub.f32 %v861, %v868
      %v871 = vmul.f32 %v869, 1.442695
      %v872 = vpow.pop %v871
      %v873 = vmul.f32 %v870, 1.442695
      %v874 = vpow.pop %v873
      %v875 = vsel %vm862, %v872, 0.0
      %876 = vadd.xlane.f32.xlu0 %v875
      %v877 = vpop.xlane.xlu0 %876
      %v878 = vsel %vm862, %v874, 0.0
      %879 = vadd.xlane.f32.xlu0 %v878
      %v880 = vpop.xlane.xlu0 %879
      %v881 = vrcp.pop %v877
      %v882 = vmul.f32 %v877, %v881
      %v883 = vsub.f32 1.0, %v882
      %v884 = vmul.f32 %v881, %v883
      %v885 = vadd.f32 %v881, %v884
      %vm886 = vweird.f32 %v877
      %vm887 = vweird.f32 %v881
      %vm888 = vmor %vm886, %vm887
      %v889 = vsel %vm888, %v881, %v885
      %v890 = vand.u32 2147483647, %v877
      %vm891 = vcmp.eq.f32.partialorder %v890, 8.507059e+37
      %v892 = vand.u32 %v877, 2147483648
      %v893 = vor.u32 1.1754944e-38, %v892
      %v894 = vsel %vm891, %v893, %v889
      %v895 = vmul.f32 %v872, %v894
      %v896 = vrcp.pop %v880
      %v897 = vmul.f32 %v880, %v896
      %v898 = vsub.f32 1.0, %v897
      %v899 = vmul.f32 %v896, %v898
      %v900 = vadd.f32 %v896, %v899
      %vm901 = vweird.f32 %v880
      %vm902 = vweird.f32 %v896
      %vm903 = vmor %vm901, %vm902
      %v904 = vsel %vm903, %v896, %v900
      %v905 = vand.u32 2147483647, %v880
      %vm906 = vcmp.eq.f32.partialorder %v905, 8.507059e+37
      %v907 = vand.u32 %v880, 2147483648
      %v908 = vor.u32 1.1754944e-38, %v907
      %v909 = vsel %vm906, %v908, %v904
      %v910 = vmul.f32 %v874, %v909
      %911 = vrot.lane.b32.xlu0 %v786, 64
      %v912 = vpop.permute.xlu0 %911
      %v915 = vsel %vm862, %v895, 0
      %917 = vmatpush.msra.mxu0 0.0
      %918 = vmatpush.msra.mxu0 0.0
      %919 = vmatpush.msra.mxu0 0.0
      %920 = vmatpush.msra.mxu0 0.0
      %921 = vmatpush.msra.mxu0 0.0
      %922 = vmatpush.msra.mxu0 0.0
      %923 = vmatpush.msra.mxu0 0.0
      %924 = vmatpush.msra.mxu0 0.0
      %925 = vmatpush.msra.mxu0 0.0
      %926 = vmatpush.msra.mxu0 0.0
      %927 = vmatpush.msra.mxu0 0.0
      %928 = vmatpush.msra.mxu0 0.0
      %929 = vmatpush.msra.mxu0 0.0
      %930 = vmatpush.msra.mxu0 0.0
      %931 = vmatpush.msra.mxu0 0.0
      %932 = vmatpush.msra.mxu0 %v912
      %933 = vmatmul.f32.gmra.mxu0 %v915
      %v934 = vpop.f32.mrf.mxu0
      %v935 = vadd.f32 0.0, %v934
      %936 = vdwg.mxu0
      %937 = vrot.lane.b32.xlu0 %v789, 64
      %v938 = vpop.permute.xlu0 %937
      %v941 = vsel %vm862, %v910, 0
      %943 = vmatpush.msra.mxu0 0.0
      %944 = vmatpush.msra.mxu0 0.0
      %945 = vmatpush.msra.mxu0 0.0
      %946 = vmatpush.msra.mxu0 0.0
      %947 = vmatpush.msra.mxu0 0.0
      %948 = vmatpush.msra.mxu0 0.0
      %949 = vmatpush.msra.mxu0 0.0
      %950 = vmatpush.msra.mxu0 0.0
      %951 = vmatpush.msra.mxu0 0.0
      %952 = vmatpush.msra.mxu0 0.0
      %953 = vmatpush.msra.mxu0 0.0
      %954 = vmatpush.msra.mxu0 0.0
      %955 = vmatpush.msra.mxu0 0.0
      %956 = vmatpush.msra.mxu0 0.0
      %957 = vmatpush.msra.mxu0 0.0
      %958 = vmatpush.msra.mxu0 %v938
      %959 = vmatmul.f32.gmra.mxu0 %v941
      %v960 = vpop.f32.mrf.mxu0
      %v961 = vadd.f32 0.0, %v960
      %962 = vdwg.mxu0
      %963 = vrot.lane.b32.xlu0 %v786, 112
      %v964 = vpop.permute.xlu0 %963
      %965 = vrot.lane.b32.xlu0 %v786, 80
      %v966 = vpop.permute.xlu0 %965
      %v967 = vsel %vm800, %v964, 0
      %v969 = vsel %vm800, %v966, 0
      %971 = vmatpush.xpose.msra.mxu0 0.0
      %972 = vmatpush.xpose.msra.mxu0 0.0
      %973 = vmatpush.xpose.msra.mxu0 0.0
      %974 = vmatpush.xpose.msra.mxu0 0.0
      %975 = vmatpush.xpose.msra.mxu0 0.0
      %976 = vmatpush.xpose.msra.mxu0 0.0
      %977 = vmatpush.xpose.msra.mxu0 0.0
      %978 = vmatpush.xpose.msra.mxu0 0.0
      %979 = vmatpush.xpose.msra.mxu0 0.0
      %980 = vmatpush.xpose.msra.mxu0 0.0
      %981 = vmatpush.xpose.msra.mxu0 0.0
      %982 = vmatpush.xpose.msra.mxu0 0.0
      %983 = vmatpush.xpose.msra.mxu0 0.0
      %984 = vmatpush.xpose.msra.mxu0 0.0
      %985 = vmatpush.xpose.msra.mxu0 0.0
      %986 = vmatpush.xpose.msra.mxu0 %v969
      %987 = vmatmul.f32.gmra.mxu0 %v967
      %v988 = vpop.f32.mrf.mxu0
      %v989 = vadd.f32 0.0, %v988
      %990 = vdwg.mxu0
      %991 = vrot.lane.b32.xlu0 %v789, 112
      %v992 = vpop.permute.xlu0 %991
      %993 = vrot.lane.b32.xlu0 %v789, 80
      %v994 = vpop.permute.xlu0 %993
      %v995 = vsel %vm800, %v992, 0
      %v997 = vsel %vm800, %v994, 0
      %999 = vmatpush.xpose.msra.mxu0 0.0
      %1000 = vmatpush.xpose.msra.mxu0 0.0
      %1001 = vmatpush.xpose.msra.mxu0 0.0
      %1002 = vmatpush.xpose.msra.mxu0 0.0
      %1003 = vmatpush.xpose.msra.mxu0 0.0
      %1004 = vmatpush.xpose.msra.mxu0 0.0
      %1005 = vmatpush.xpose.msra.mxu0 0.0
      %1006 = vmatpush.xpose.msra.mxu0 0.0
      %1007 = vmatpush.xpose.msra.mxu0 0.0
      %1008 = vmatpush.xpose.msra.mxu0 0.0
      %1009 = vmatpush.xpose.msra.mxu0 0.0
      %1010 = vmatpush.xpose.msra.mxu0 0.0
      %1011 = vmatpush.xpose.msra.mxu0 0.0
      %1012 = vmatpush.xpose.msra.mxu0 0.0
      %1013 = vmatpush.xpose.msra.mxu0 0.0
      %1014 = vmatpush.xpose.msra.mxu0 %v997
      %1015 = vmatmul.f32.gmra.mxu0 %v995
      %v1016 = vpop.f32.mrf.mxu0
      %v1017 = vadd.f32 0.0, %v1016
      %1018 = vdwg.mxu0
      %v1019 = vmul.f32 %v989, 0.25
      %v1020 = vmul.f32 %v1017, 0.25
      %v1021 = vadd.f32 %v1019, %v856
      %v1022 = vadd.f32 %v1020, %v857
      %v1023 = vsel %vm862, %v1021, -inf
      %1024 = vmax.xlane.f32.xlu0 %v1023
      %v1025 = vpop.xlane.xlu0 %1024
      %v1026 = vsel %vm862, %v1022, -inf
      %1027 = vmax.xlane.f32.xlu0 %v1026
      %v1028 = vpop.xlane.xlu0 %1027
      %v1029 = vsub.f32 %v1021, %v1025
      %v1030 = vsub.f32 %v1022, %v1028
      %v1031 = vmul.f32 %v1029, 1.442695
      %v1032 = vpow.pop %v1031
      %v1033 = vmul.f32 %v1030, 1.442695
      %v1034 = vpow.pop %v1033
      %v1035 = vsel %vm862, %v1032, 0.0
      %1036 = vadd.xlane.f32.xlu0 %v1035
      %v1037 = vpop.xlane.xlu0 %1036
      %v1038 = vsel %vm862, %v1034, 0.0
      %1039 = vadd.xlane.f32.xlu0 %v1038
      %v1040 = vpop.xlane.xlu0 %1039
      %v1041 = vrcp.pop %v1037
      %v1042 = vmul.f32 %v1037, %v1041
      %v1043 = vsub.f32 1.0, %v1042
      %v1044 = vmul.f32 %v1041, %v1043
      %v1045 = vadd.f32 %v1041, %v1044
      %vm1046 = vweird.f32 %v1037
      %vm1047 = vweird.f32 %v1041
      %vm1048 = vmor %vm1046, %vm1047
      %v1049 = vsel %vm1048, %v1041, %v1045
      %v1050 = vand.u32 2147483647, %v1037
      %vm1051 = vcmp.eq.f32.partialorder %v1050, 8.507059e+37
      %v1052 = vand.u32 %v1037, 2147483648
      %v1053 = vor.u32 1.1754944e-38, %v1052
      %v1054 = vsel %vm1051, %v1053, %v1049
      %v1055 = vmul.f32 %v1032, %v1054
      %v1056 = vrcp.pop %v1040
      %v1057 = vmul.f32 %v1040, %v1056
      %v1058 = vsub.f32 1.0, %v1057
      %v1059 = vmul.f32 %v1056, %v1058
      %v1060 = vadd.f32 %v1056, %v1059
      %vm1061 = vweird.f32 %v1040
      %vm1062 = vweird.f32 %v1056
      %vm1063 = vmor %vm1061, %vm1062
      %v1064 = vsel %vm1063, %v1056, %v1060
      %v1065 = vand.u32 2147483647, %v1040
      %vm1066 = vcmp.eq.f32.partialorder %v1065, 8.507059e+37
      %v1067 = vand.u32 %v1040, 2147483648
      %v1068 = vor.u32 1.1754944e-38, %v1067
      %v1069 = vsel %vm1066, %v1068, %v1064
      %v1070 = vmul.f32 %v1034, %v1069
      %1071 = vrot.lane.b32.xlu0 %v786, 48
      %v1072 = vpop.permute.xlu0 %1071
      %v1075 = vsel %vm862, %v1055, 0
      %1077 = vmatpush.msra.mxu0 0.0
      %1078 = vmatpush.msra.mxu0 0.0
      %1079 = vmatpush.msra.mxu0 0.0
      %1080 = vmatpush.msra.mxu0 0.0
      %1081 = vmatpush.msra.mxu0 0.0
      %1082 = vmatpush.msra.mxu0 0.0
      %1083 = vmatpush.msra.mxu0 0.0
      %1084 = vmatpush.msra.mxu0 0.0
      %1085 = vmatpush.msra.mxu0 0.0
      %1086 = vmatpush.msra.mxu0 0.0
      %1087 = vmatpush.msra.mxu0 0.0
      %1088 = vmatpush.msra.mxu0 0.0
      %1089 = vmatpush.msra.mxu0 0.0
      %1090 = vmatpush.msra.mxu0 0.0
      %1091 = vmatpush.msra.mxu0 0.0
      %1092 = vmatpush.msra.mxu0 %v1072
      %1093 = vmatmul.f32.gmra.mxu0 %v1075
      %v1094 = vpop.f32.mrf.mxu0
      %v1095 = vadd.f32 0.0, %v1094
      %1096 = vdwg.mxu0
      %1097 = vrot.lane.b32.xlu0 %v789, 48
      %v1098 = vpop.permute.xlu0 %1097
      %v1101 = vsel %vm862, %v1070, 0
      %1103 = vmatpush.msra.mxu0 0.0
      %1104 = vmatpush.msra.mxu0 0.0
      %1105 = vmatpush.msra.mxu0 0.0
      %1106 = vmatpush.msra.mxu0 0.0
      %1107 = vmatpush.msra.mxu0 0.0
      %1108 = vmatpush.msra.mxu0 0.0
      %1109 = vmatpush.msra.mxu0 0.0
      %1110 = vmatpush.msra.mxu0 0.0
      %1111 = vmatpush.msra.mxu0 0.0
      %1112 = vmatpush.msra.mxu0 0.0
      %1113 = vmatpush.msra.mxu0 0.0
      %1114 = vmatpush.msra.mxu0 0.0
      %1115 = vmatpush.msra.mxu0 0.0
      %1116 = vmatpush.msra.mxu0 0.0
      %1117 = vmatpush.msra.mxu0 0.0
      %1118 = vmatpush.msra.mxu0 %v1098
      %1119 = vmatmul.f32.gmra.mxu0 %v1101
      %v1120 = vpop.f32.mrf.mxu0
      %v1121 = vadd.f32 0.0, %v1120
      %1122 = vdwg.mxu0
      %v1124 = vsel %vm800, %v1095, 0
      %v1127 = vsel %vm800, %v1121, 0
      %1129 = vmatpush.msra.mxu0 0.0
      %1130 = vmatpush.msra.mxu0 0.0
      %1131 = vmatpush.msra.mxu0 0.0
      %1132 = vmatpush.msra.mxu0 0.0
      %1133 = vmatpush.msra.mxu0 0.0
      %1134 = vmatpush.msra.mxu0 0.0
      %1135 = vmatpush.msra.mxu0 0.0
      %1136 = vmatpush.msra.mxu0 0.0
      %1137 = vmatpush.msra.mxu0 0.0
      %1138 = vmatpush.msra.mxu0 0.0
      %1139 = vmatpush.msra.mxu0 0.0
      %1140 = vmatpush.msra.mxu0 0.0
      %1141 = vmatpush.msra.mxu0 0.0
      %1142 = vmatpush.msra.mxu0 0.0
      %1143 = vmatpush.msra.mxu0 %v794
      %1144 = vmatpush.msra.mxu0 %v793
      %1145 = vmatmul.f32.gmra.mxu0 %v1124
      %v1146 = vpop.f32.mrf.mxu0
      %v1147 = vadd.f32 0.0, %v1146
      %1148 = vmatmul.f32.gmra.mxu0 %v1127
      %v1149 = vpop.f32.mrf.mxu0
      %v1150 = vadd.f32 0.0, %v1149
      %1151 = vdwg.mxu0
      %v1153 = vsel %vm800, %v935, 0
      %v1156 = vsel %vm800, %v961, 0
      %1158 = vmatpush.msra.mxu0 0.0
      %1159 = vmatpush.msra.mxu0 0.0
      %1160 = vmatpush.msra.mxu0 0.0
      %1161 = vmatpush.msra.mxu0 0.0
      %1162 = vmatpush.msra.mxu0 0.0
      %1163 = vmatpush.msra.mxu0 0.0
      %1164 = vmatpush.msra.mxu0 0.0
      %1165 = vmatpush.msra.mxu0 0.0
      %1166 = vmatpush.msra.mxu0 0.0
      %1167 = vmatpush.msra.mxu0 0.0
      %1168 = vmatpush.msra.mxu0 0.0
      %1169 = vmatpush.msra.mxu0 0.0
      %1170 = vmatpush.msra.mxu0 0.0
      %1171 = vmatpush.msra.mxu0 0.0
      %1172 = vmatpush.msra.mxu0 %v792
      %1173 = vmatpush.msra.mxu0 %v791
      %1174 = vmatmul.f32.gmra.mxu0 %v1153
      %v1175 = vpop.f32.mrf.mxu0
      %v1176 = vadd.f32 %v1147, %v1175
      %1177 = vmatmul.f32.gmra.mxu0 %v1156
      %v1178 = vpop.f32.mrf.mxu0
      %v1179 = vadd.f32 %v1150, %v1178
      %1180 = vdwg.mxu0
      %v1181 = vld [vmem:[%s650] sm:$0x1]
      %v1183 = vperm.slane %v1181, 0
      %v1185 = vadd.f32 %v1176, %v1183
      %v1186 = vadd.f32 %v1179, %v1183
      %v1187 = vadd.f32 %v1185, %v751
      %v1188 = vadd.f32 %v1186, %v752
      %v1189 = vld [vmem:[%s653] sm:$0x1]
      %v1190 = vld [vmem:[%s656] sm:$0x1]
      %v1191 = vsel %vm761, %v1187, 0.0
      %1192 = vadd.xlane.f32.xlu0 %v1191
      %v1193 = vpop.xlane.xlu0 %1192
      %v1194 = vsel %vm761, %v1188, 0.0
      %1195 = vadd.xlane.f32.xlu0 %v1194
      %v1196 = vpop.xlane.xlu0 %1195
      %v1197 = vrcp.pop 32.0
      %v1198 = vmul.f32 32.0, %v1197
      %v1199 = vsub.f32 1.0, %v1198
      %v1200 = vmul.f32 %v1197, %v1199
      %v1201 = vadd.f32 %v1197, %v1200
      %vm1202 = vweird.f32 %v1197
      %v1203 = vsel %vm1202, %v1197, %v1201
      %v1204 = vmul.f32 %v1193, %v1203
      %v1205 = vmul.f32 %v1196, %v1203
      %v1206 = vsub.f32 %v1187, %v1204
      %v1207 = vsub.f32 %v1188, %v1205
      %v1208 = vmul.f32 %v1206, %v1206
      %v1209 = vmul.f32 %v1207, %v1207
      %v1210 = vsel %vm761, %v1208, 0.0
      %1211 = vadd.xlane.f32.xlu0 %v1210
      %v1212 = vpop.xlane.xlu0 %1211
      %v1213 = vsel %vm761, %v1209, 0.0
      %1214 = vadd.xlane.f32.xlu0 %v1213
      %v1215 = vpop.xlane.xlu0 %1214
      %v1216 = vmul.f32 %v1212, %v1203
      %v1217 = vmul.f32 %v1215, %v1203
      %v1218 = vadd.f32 %v1216, 1e-12
      %v1219 = vadd.f32 %v1217, 1e-12
      %v1220 = vrsqrt.pop %v1218
      %v1221 = vmul.f32 %v1220, %v1218
      %v1222 = vmul.f32 %v1221, %v1220
      %v1223 = vmul.f32 0.5, %v1222
      %v1224 = vsub.f32 1.5, %v1223
      %v1225 = vmul.f32 %v1220, %v1224
      %vm1226 = vweird.f32 %v1218
      %vm1227 = vweird.f32 %v1220
      %vm1228 = vmor %vm1226, %vm1227
      %v1229 = vsel %vm1228, %v1220, %v1225
      %v1230 = vrsqrt.pop %v1219
      %v1231 = vmul.f32 %v1230, %v1219
      %v1232 = vmul.f32 %v1231, %v1230
      %v1233 = vmul.f32 0.5, %v1232
      %v1234 = vsub.f32 1.5, %v1233
      %v1235 = vmul.f32 %v1230, %v1234
      %vm1236 = vweird.f32 %v1219
      %vm1237 = vweird.f32 %v1230
      %vm1238 = vmor %vm1236, %vm1237
      %v1239 = vsel %vm1238, %v1230, %v1235
      %v1240 = vmul.f32 %v1206, %v1229
      %v1241 = vmul.f32 %v1207, %v1239
      %v1243 = vperm.slane %v1189, 0
      %v1245 = vmul.f32 %v1240, %v1243
      %v1246 = vmul.f32 %v1241, %v1243
      %v1248 = vperm.slane %v1190, 0
      %v1250 = vadd.f32 %v1245, %v1248
      %v1251 = vadd.f32 %v1246, %v1248
      %v1252 = vld [vmem:[%s661] sm:$0xff]
      %v1253 = vld [vmem:[%s661 + $0x8] sm:$0xff]
      %v1254 = vld [vmem:[%s661 + $0x10] sm:$0xff]
      %v1255 = vld [vmem:[%s661 + $0x18] sm:$0xff]
      %v1256 = vld [vmem:[%s664] sm:$0x1]
      %v1258 = vperm.slane %v1256, 0
      %v1261 = vsel %vm761, %v1250, 0
      %v1264 = vsel %vm761, %v1251, 0
      %1266 = vmatpush.msra.mxu0 0.0
      %1267 = vmatpush.msra.mxu0 0.0
      %1268 = vmatpush.msra.mxu0 0.0
      %1269 = vmatpush.msra.mxu0 0.0
      %1270 = vmatpush.msra.mxu0 0.0
      %1271 = vmatpush.msra.mxu0 0.0
      %1272 = vmatpush.msra.mxu0 0.0
      %1273 = vmatpush.msra.mxu0 0.0
      %1274 = vmatpush.msra.mxu0 0.0
      %1275 = vmatpush.msra.mxu0 0.0
      %1276 = vmatpush.msra.mxu0 0.0
      %1277 = vmatpush.msra.mxu0 0.0
      %1278 = vmatpush.msra.mxu0 %v1255
      %1279 = vmatpush.msra.mxu0 %v1254
      %1280 = vmatpush.msra.mxu0 %v1253
      %1281 = vmatpush.msra.mxu0 %v1252
      %1282 = vmatmul.f32.gmra.mxu0 %v1261
      %v1283 = vpop.f32.mrf.mxu0
      %v1284 = vadd.f32 %v1258, %v1283
      %1285 = vmatmul.f32.gmra.mxu0 %v1264
      %v1286 = vpop.f32.mrf.mxu0
      %v1287 = vadd.f32 %v1258, %v1286
      %1288 = vdwg.mxu0
      %v1289 = vmul.f32 %v1284, 0.5
      %v1290 = vmul.f32 %v1287, 0.5
      %v1291 = vmul.f32 %v1284, 0.70710677
      %v1292 = vmul.f32 %v1287, 0.70710677
      %v1293 = vmul.f32 %v1291, %v1291
      %v1294 = vmin.f32 16.0, %v1293
      %v1295 = vmul.f32 %v1294, 2.1237322e-06
      %v1296 = vadd.f32 %v1295, 0.00028619796
      %v1297 = vmul.f32 %v1294, %v1296
      %v1298 = vadd.f32 %v1297, 0.0036580483
      %v1299 = vmul.f32 %v1294, %v1298
      %v1300 = vadd.f32 %v1299, 0.05243302
      %v1301 = vmul.f32 %v1294, %v1300
      %v1302 = vadd.f32 %v1301, 0.18741608
      %v1303 = vmul.f32 %v1294, %v1302
      %v1304 = vadd.f32 %v1303, 1.1283791
      %v1305 = vmul.f32 %v1291, %v1304
      %v1306 = vmul.f32 %v1294, 3.8918573e-05
      %v1307 = vadd.f32 %v1306, 0.001143296
      %v1308 = vmul.f32 %v1294, %v1307
      %v1309 = vadd.f32 %v1308, 0.014752088
      %v1310 = vmul.f32 %v1294, %v1309
      %v1311 = vadd.f32 %v1310, 0.112945676
      %v1312 = vmul.f32 %v1294, %v1311
      %v1313 = vadd.f32 %v1312, 0.4994258
      %v1314 = vmul.f32 %v1294, %v1313
      %v1315 = vadd.f32 %v1314, 1.0
      %v1316 = vrcp.pop %v1315
      %v1317 = vmul.f32 %v1315, %v1316
      %v1318 = vsub.f32 1.0, %v1317
      %v1319 = vmul.f32 %v1316, %v1318
      %v1320 = vadd.f32 %v1316, %v1319
      %vm1321 = vweird.f32 %v1315
      %vm1322 = vweird.f32 %v1316
      %vm1323 = vmor %vm1321, %vm1322
      %v1324 = vsel %vm1323, %v1316, %v1320
      %v1325 = vand.u32 2147483647, %v1315
      %vm1326 = vcmp.eq.f32.partialorder %v1325, 8.507059e+37
      %v1327 = vand.u32 %v1315, 2147483648
      %v1328 = vor.u32 1.1754944e-38, %v1327
      %v1329 = vsel %vm1326, %v1328, %v1324
      %v1330 = vmul.f32 %v1305, %v1329
      %v1331 = vmin.f32 %v1330, 1.0
      %v1332 = vmax.f32 %v1331, -1.0
      %v1333 = vmul.f32 %v1292, %v1292
      %v1334 = vmin.f32 16.0, %v1333
      %v1335 = vmul.f32 %v1334, 2.1237322e-06
      %v1336 = vadd.f32 %v1335, 0.00028619796
      %v1337 = vmul.f32 %v1334, %v1336
      %v1338 = vadd.f32 %v1337, 0.0036580483
      %v1339 = vmul.f32 %v1334, %v1338
      %v1340 = vadd.f32 %v1339, 0.05243302
      %v1341 = vmul.f32 %v1334, %v1340
      %v1342 = vadd.f32 %v1341, 0.18741608
      %v1343 = vmul.f32 %v1334, %v1342
      %v1344 = vadd.f32 %v1343, 1.1283791
      %v1345 = vmul.f32 %v1292, %v1344
      %v1346 = vmul.f32 %v1334, 3.8918573e-05
      %v1347 = vadd.f32 %v1346, 0.001143296
      %v1348 = vmul.f32 %v1334, %v1347
      %v1349 = vadd.f32 %v1348, 0.014752088
      %v1350 = vmul.f32 %v1334, %v1349
      %v1351 = vadd.f32 %v1350, 0.112945676
      %v1352 = vmul.f32 %v1334, %v1351
      %v1353 = vadd.f32 %v1352, 0.4994258
      %v1354 = vmul.f32 %v1334, %v1353
      %v1355 = vadd.f32 %v1354, 1.0
      %v1356 = vrcp.pop %v1355
      %v1357 = vmul.f32 %v1355, %v1356
      %v1358 = vsub.f32 1.0, %v1357
      %v1359 = vmul.f32 %v1356, %v1358
      %v1360 = vadd.f32 %v1356, %v1359
      %vm1361 = vweird.f32 %v1355
      %vm1362 = vweird.f32 %v1356
      %vm1363 = vmor %vm1361, %vm1362
      %v1364 = vsel %vm1363, %v1356, %v1360
      %v1365 = vand.u32 2147483647, %v1355
      %vm1366 = vcmp.eq.f32.partialorder %v1365, 8.507059e+37
      %v1367 = vand.u32 %v1355, 2147483648
      %v1368 = vor.u32 1.1754944e-38, %v1367
      %v1369 = vsel %vm1366, %v1368, %v1364
      %v1370 = vmul.f32 %v1345, %v1369
      %v1371 = vmin.f32 %v1370, 1.0
      %v1372 = vmax.f32 %v1371, -1.0
      %v1373 = vadd.f32 %v1332, 1.0
      %v1374 = vadd.f32 %v1372, 1.0
      %v1375 = vmul.f32 %v1289, %v1373
      %v1376 = vmul.f32 %v1290, %v1374
      %v1377 = vld [vmem:[%s669] sm:$0xff]
      %v1378 = vld [vmem:[%s669 + $0x8] sm:$0xff]
      %v1379 = vld [vmem:[%s669 + $0x10] sm:$0xff]
      %v1380 = vld [vmem:[%s669 + $0x18] sm:$0xff]
      %v1381 = vld [vmem:[%s669 + $0x20] sm:$0xff]
      %v1382 = vld [vmem:[%s669 + $0x28] sm:$0xff]
      %v1383 = vld [vmem:[%s669 + $0x30] sm:$0xff]
      %v1384 = vld [vmem:[%s669 + $0x38] sm:$0xff]
      %v1385 = vld [vmem:[%s669 + $0x40] sm:$0xff]
      %v1386 = vld [vmem:[%s669 + $0x48] sm:$0xff]
      %v1387 = vld [vmem:[%s669 + $0x50] sm:$0xff]
      %v1388 = vld [vmem:[%s669 + $0x58] sm:$0xff]
      %v1389 = vld [vmem:[%s669 + $0x60] sm:$0xff]
      %v1390 = vld [vmem:[%s669 + $0x68] sm:$0xff]
      %v1391 = vld [vmem:[%s669 + $0x70] sm:$0xff]
      %v1392 = vld [vmem:[%s669 + $0x78] sm:$0xff]
      %v1393 = vld [vmem:[%s672] sm:$0x1]
      %v1395 = vperm.slane %v1393, 0
      %1397 = vmatpush.msra.mxu0 %v1392
      %1398 = vmatpush.msra.mxu0 %v1391
      %1399 = vmatpush.msra.mxu0 %v1390
      %1400 = vmatpush.msra.mxu0 %v1389
      %1401 = vmatpush.msra.mxu0 %v1388
      %1402 = vmatpush.msra.mxu0 %v1387
      %1403 = vmatpush.msra.mxu0 %v1386
      %1404 = vmatpush.msra.mxu0 %v1385
      %1405 = vmatpush.msra.mxu0 %v1384
      %1406 = vmatpush.msra.mxu0 %v1383
      %1407 = vmatpush.msra.mxu0 %v1382
      %1408 = vmatpush.msra.mxu0 %v1381
      %1409 = vmatpush.msra.mxu0 %v1380
      %1410 = vmatpush.msra.mxu0 %v1379
      %1411 = vmatpush.msra.mxu0 %v1378
      %1412 = vmatpush.msra.mxu0 %v1377
      %1413 = vmatmul.f32.gmra.mxu0 %v1375
      %v1414 = vpop.f32.mrf.mxu0
      %v1415 = vadd.f32 %v1395, %v1414
      %1416 = vmatmul.f32.gmra.mxu0 %v1376
      %v1417 = vpop.f32.mrf.mxu0
      %v1418 = vadd.f32 %v1395, %v1417
      %1419 = vdwg.mxu0
      %v1420 = vadd.f32 %v1415, %v1250
      %v1421 = vadd.f32 %v1418, %v1251
      %v1422 = vld [vmem:[%s675] sm:$0x1]
      %v1423 = vld [vmem:[%s678] sm:$0x1]
      %v1424 = vsel %vm761, %v1420, 0.0
      %1425 = vadd.xlane.f32.xlu0 %v1424
      %v1426 = vpop.xlane.xlu0 %1425
      %v1427 = vsel %vm761, %v1421, 0.0
      %1428 = vadd.xlane.f32.xlu0 %v1427
      %v1429 = vpop.xlane.xlu0 %1428
      %v1430 = vmul.f32 %v1426, %v1203
      %v1431 = vmul.f32 %v1429, %v1203
      %v1432 = vsub.f32 %v1420, %v1430
      %v1433 = vsub.f32 %v1421, %v1431
      %v1434 = vmul.f32 %v1432, %v1432
      %v1435 = vmul.f32 %v1433, %v1433
      %v1436 = vsel %vm761, %v1434, 0.0
      %1437 = vadd.xlane.f32.xlu0 %v1436
      %v1438 = vpop.xlane.xlu0 %1437
      %v1439 = vsel %vm761, %v1435, 0.0
      %1440 = vadd.xlane.f32.xlu0 %v1439
      %v1441 = vpop.xlane.xlu0 %1440
      %v1442 = vmul.f32 %v1438, %v1203
      %v1443 = vmul.f32 %v1441, %v1203
      %v1444 = vadd.f32 %v1442, 1e-12
      %v1445 = vadd.f32 %v1443, 1e-12
      %v1446 = vrsqrt.pop %v1444
      %v1447 = vmul.f32 %v1446, %v1444
      %v1448 = vmul.f32 %v1447, %v1446
      %v1449 = vmul.f32 0.5, %v1448
      %v1450 = vsub.f32 1.5, %v1449
      %v1451 = vmul.f32 %v1446, %v1450
      %vm1452 = vweird.f32 %v1444
      %vm1453 = vweird.f32 %v1446
      %vm1454 = vmor %vm1452, %vm1453
      %v1455 = vsel %vm1454, %v1446, %v1451
      %v1456 = vrsqrt.pop %v1445
      %v1457 = vmul.f32 %v1456, %v1445
      %v1458 = vmul.f32 %v1457, %v1456
      %v1459 = vmul.f32 0.5, %v1458
      %v1460 = vsub.f32 1.5, %v1459
      %v1461 = vmul.f32 %v1456, %v1460
      %vm1462 = vweird.f32 %v1445
      %vm1463 = vweird.f32 %v1456
      %vm1464 = vmor %vm1462, %vm1463
      %v1465 = vsel %vm1464, %v1456, %v1461
      %v1466 = vmul.f32 %v1432, %v1455
      %v1467 = vmul.f32 %v1433, %v1465
      %v1469 = vperm.slane %v1422, 0
      %v1471 = vmul.f32 %v1466, %v1469
      %v1472 = vmul.f32 %v1467, %v1469
      %v1474 = vperm.slane %v1423, 0
      %v1476 = vadd.f32 %v1471, %v1474
      %v1477 = vadd.f32 %v1472, %v1474
      %1478 = vst.msk [vmem:[%s16] sm:$0xff] %vm761, %v1476
      %1479 = vst.msk [vmem:[%s16 + $0x8] sm:$0xff] %vm761, %v1477
      // Predicated region
      $region89: #{bert_forward.1} parent=83 // pred_check
        %p1480 = pneg %p436
      $region90: #{bert_forward.1} parent=83 // pred_check_branch
        %1482 = sbr.rel (%p1480) target = $region92
      $region91: #{bert_forward.1} parent=83 // pred_region
        _
      $region92: #{bert_forward.1} parent=83 // pred_fallthru
        _
      // Predicated region
      $region93: #{bert_forward.1} parent=83 // pred_check
        %p1483 = pneg %p436
      $region94: #{bert_forward.1} parent=83 // pred_check_branch
        %1485 = sbr.rel (%p1483) target = $region96
      $region95: #{bert_forward.1} parent=83 // pred_region
        _
      $region96: #{bert_forward.1} parent=83 // pred_fallthru
        _
    $region84: #{bert_forward.1} parent=5 // pred_fallthru
      _
    %p1486 = scmp.le.s32.totalorder 2, %s22
    // Predicated region
    $region97: #{bert_forward.1} parent=5 // pred_check
      %p1487 = pneg %p1486
    $region98: #{bert_forward.1} parent=5 // pred_check_branch
      %1489 = sbr.rel (%p1487) target = $region100
    $region99: #{bert_forward.1} parent=5 // pred_region
      %s1490 = ssub.s32 %s22, 2
    $region100: #{bert_forward.1} parent=5 // pred_fallthru
      _
  $region6: #{bert_forward.1} parent=0 // loop_footer
    %s26 = sadd.s32 1, %s22
  $region7: #{bert_forward.1} parent=0 // loop_footer_branch
    %21 = sbr.rel target = $region3
  $region8: #{bert_forward.1} parent=0 // loop_exit
    _

</llo_original>
